<compile_context>
chip_gen: v7x
topology: tpu7x:2x2x1
jax: 0.10.0
libtpu: 0.0.40
codegen_flags: <defaults>
</compile_context>

<pallas_src>
import math
import numpy as np
import jax
import jax.numpy as jnp
from jax.experimental import pallas as pl
from jax.experimental.pallas import tpu as pltpu


# ----------------------------------------------------------------------------
# Constant operator construction (compile time, NumPy, float64).
# ----------------------------------------------------------------------------
def _filters(scale, H, W):
    """1-D Gaussian + nearest-decimation operators A_h (Ho,H), A_w (Wo,W)."""
    sigma = (1.0 / scale - 1.0) / 2.0
    ks = 2 * round(sigma * 4) + 1          # same formula as the PyTorch module
    ka = ks // 2                           # ks is odd -> kb == ka
    ax = np.arange(ks, dtype=np.float64)
    g = np.exp(-((ax - (ks - 1) / 2.0) ** 2) / (2.0 * sigma ** 2))
    g = g / g.sum()                        # outer(g, g) == module's normalized 2-D kernel

    Ho = int(math.floor(H * scale))
    Wo = int(math.floor(W * scale))
    idx_h = np.minimum(np.floor(np.arange(Ho) * (H / Ho)).astype(np.int64), H - 1)
    idx_w = np.minimum(np.floor(np.arange(Wo) * (W / Wo)).astype(np.int64), W - 1)

    def one_dim(idx, size):
        A = np.zeros((idx.shape[0], size), np.float64)
        for o, src in enumerate(idx):
            for t in range(ks):
                r = int(src) + t - ka
                if 0 <= r < size:          # zero padding => out-of-range taps vanish
                    A[o, r] += g[t]
        return A

    return one_dim(idx_h, H), one_dim(idx_w, W), Ho, Wo


def _choose_channel_blocks(NC, H, W, Ho, Wo):
    """Pick (num_blocks, channels_per_block) for the 1-D 'parallel' grid."""
    vmem_budget = 16 * 1024 * 1024         # conservative for v7x (64 MiB VMEM, 32 MiB scoped)

    def fits(bc, nb):
        if nb > 1 and ((bc * H) % 8 != 0 or (bc * Ho) % 8 != 0):
            return False                   # keep partial blocks sublane-tile aligned
        vmem = 4 * (2 * bc * H * W         # double-buffered input block
                    + 2 * bc * Ho * Wo     # double-buffered output block
                    + bc * Ho * bc * H     # block-diagonal H operator
                    + W * Wo)              # W operator
        return vmem <= vmem_budget

    for nb in range(2, NC + 1):            # prefer >= 2 blocks: v7x has 2 TensorCores
        if NC % nb == 0 and fits(NC // nb, nb):
            return nb, NC // nb
    return 1, NC                           # fallback: single coarse block (always legal)


# ----------------------------------------------------------------------------
# Pallas kernel: one block of bc channels == two MXU matmuls.
# ----------------------------------------------------------------------------
def _aa_conv_kernel(x_ref, bdah_ref, awt_ref, o_ref):
    # x_ref   : (bc*H, W)       unpadded input rows for bc channels
    # bdah_ref: (bc*Ho, bc*H)   block-diagonal H-filter (+ H decimation), constant
    # awt_ref : (W, Wo)         W-filter (+ W decimation), constant (A_w^T)
    # o_ref   : (bc*Ho, Wo)
    x = x_ref[...].astype(jnp.float32)
    # W pass (Gaussian along W fused with nearest decimation) on the MXU.
    y = jnp.dot(x, awt_ref[...],
                preferred_element_type=jnp.float32,
                precision=jax.lax.Precision.HIGHEST)            # (bc*H, Wo)
    # H pass (Gaussian along H fused with nearest decimation) on the MXU.
    z = jnp.dot(bdah_ref[...], y,
                preferred_element_type=jnp.float32,
                precision=jax.lax.Precision.HIGHEST)            # (bc*Ho, Wo)
    o_ref[...] = z.astype(o_ref.dtype)


# ----------------------------------------------------------------------------
# Public wrapper: AntiAliasInterpolation2d.forward
# ----------------------------------------------------------------------------
def anti_alias_interpolation2d(x, channels, scale):
    """Pallas TPU implementation of AntiAliasInterpolation2d.forward (NCHW)."""
    if scale == 1.0:
        return x
    if not (0.0 < scale < 1.0):
        raise ValueError("AntiAliasInterpolation2d is a downsampler: need 0 < scale <= 1.")
    N, C, H, W = x.shape
    assert C == channels
    NC = N * C

    A_h, A_w, Ho, Wo = _filters(scale, H, W)
    nb, bc = _choose_channel_blocks(NC, H, W, Ho, Wo)

    # Block-diagonal H operator: applies A_h independently to each of the bc
    # channels stacked along the row axis of the (bc*H, W) input block.
    bdah = np.zeros((bc * Ho, bc * H), np.float32)
    for c in range(bc):
        bdah[c * Ho:(c + 1) * Ho, c * H:(c + 1) * H] = A_h.astype(np.float32)
    awt = np.ascontiguousarray(A_w.T).astype(np.float32)        # (W, Wo)

    x_rows = x.reshape(NC * H, W)                               # free, contiguous view

    out_rows = pl.pallas_call(
        _aa_conv_kernel,
        out_shape=jax.ShapeDtypeStruct((NC * Ho, Wo), x.dtype),
        grid_spec=pltpu.PrefetchScalarGridSpec(
            num_scalar_prefetch=0,
            grid=(nb,),
            in_specs=[
                pl.BlockSpec((bc * H, W), lambda i: (i, 0)),        # channel block of x
                pl.BlockSpec((bc * Ho, bc * H), lambda i: (0, 0)),  # constant operator
                pl.BlockSpec((W, Wo), lambda i: (0, 0)),            # constant operator
            ],
            out_specs=pl.BlockSpec((bc * Ho, Wo), lambda i: (i, 0)),
        ),
        compiler_params=pltpu.CompilerParams(
            dimension_semantics=("parallel",),                   # shard blocks across TCs (v7x)
        ),
    )(x_rows, jnp.asarray(bdah), jnp.asarray(awt))

    return out_rows.reshape(N, C, Ho, Wo)


# ----------------------------------------------------------------------------
# Independent float64 NumPy reference (mirrors the PyTorch forward exactly).
# ----------------------------------------------------------------------------
def _reference_numpy(x, scale):
    x = np.asarray(x, dtype=np.float64)
    N, C, H, W = x.shape
    sigma = (1.0 / scale - 1.0) / 2.0
    ks = 2 * round(sigma * 4) + 1
    ka = ks // 2
    kb = ka                                                     # ks is odd
    ax = np.arange(ks, dtype=np.float64)
    g = np.exp(-((ax - (ks - 1) / 2.0) ** 2) / (2.0 * sigma ** 2))
    k2 = np.outer(g, g)
    k2 /= k2.sum()
    xp = np.pad(x, ((0, 0), (0, 0), (ka, kb), (ka, kb)))
    conv = np.zeros_like(x)
    for u in range(ks):
        for v in range(ks):
            conv += k2[u, v] * xp[:, :, u:u + H, v:v + W]
    Ho = int(math.floor(H * scale))
    Wo = int(math.floor(W * scale))
    idx_h = np.minimum(np.floor(np.arange(Ho) * (H / Ho)).astype(np.int64), H - 1)
    idx_w = np.minimum(np.floor(np.arange(Wo) * (W / Wo)).astype(np.int64), W - 1)
    return conv[:, :, idx_h[:, None], idx_w[None, :]]


if __name__ == "__main__":
    N, C, H, W = 2, 4, 16, 16
    scale = 0.5   # sigma=0.5, kernel_size=5, ka=kb=2, output (2, 4, 8, 8)
    key = jax.random.PRNGKey(0)
    x = jax.random.normal(key, (N, C, H, W), dtype=jnp.float32)

    out = jax.block_until_ready(anti_alias_interpolation2d(x, channels=C, scale=scale))

    assert out.shape == (N, C, int(H * scale), int(W * scale))
    ref = _reference_numpy(np.asarray(x), scale)
    # MXU f32 (HIGHEST precision) matmuls vs. float64 reference.
    np.testing.assert_allclose(np.asarray(out), ref, rtol=1e-4, atol=1e-4)

    print("KERNEL_OK")
</pallas_src>

<mosaic_0001>
module attributes {stable_mosaic.version = 11 : i64} {
  func.func @_aa_conv_kernel(%arg0: i32, %arg1: memref<64x16xf32, #tpu.memory_space<vmem>>, %arg2: memref<32x64xf32, #tpu.memory_space<vmem>>, %arg3: memref<16x8xf32, #tpu.memory_space<vmem>>, %arg4: memref<32x8xf32, #tpu.memory_space<vmem>>) attributes {dimension_semantics = [#tpu.dimension_semantics<parallel>], iteration_bounds = array<i64: 2>, scalar_prefetch = 0 : i64, scratch_operands = 0 : i64, tpu.core_type = #tpu.core_type<tc>, window_params = [{transform_indices = @transform_0, window_bounds = array<i64: 64, 16>}, {pipeline_mode = #tpu.pipeline_mode<synchronous>, transform_indices = @transform_1, window_bounds = array<i64: 32, 64>}, {pipeline_mode = #tpu.pipeline_mode<synchronous>, transform_indices = @transform_2, window_bounds = array<i64: 16, 8>}, {transform_indices = @transform_3, window_bounds = array<i64: 32, 8>}]} {
    %c0 = arith.constant 0 : index
    %c0_0 = arith.constant 0 : index
    %0 = vector.load %arg1[%c0, %c0_0] : memref<64x16xf32, #tpu.memory_space<vmem>>, vector<64x16xf32>
    %c0_1 = arith.constant 0 : index
    %c0_2 = arith.constant 0 : index
    %1 = vector.load %arg3[%c0_1, %c0_2] : memref<16x8xf32, #tpu.memory_space<vmem>>, vector<16x8xf32>
    %cst = arith.constant dense<0.000000e+00> : vector<64x8xf32>
    %2 = tpu.matmul %0, %1, %cst {dimension_numbers = #tpu.dot_dimension_numbers<[1], [0], [0], [1], [0, 0, 1, 1], [], []>, precision = #tpu.contract_precision<fp32>} : vector<64x16xf32>, vector<16x8xf32>, vector<64x8xf32> -> vector<64x8xf32>
    %c0_3 = arith.constant 0 : index
    %c0_4 = arith.constant 0 : index
    %3 = vector.load %arg2[%c0_3, %c0_4] : memref<32x64xf32, #tpu.memory_space<vmem>>, vector<32x64xf32>
    %cst_5 = arith.constant dense<0.000000e+00> : vector<32x8xf32>
    %4 = tpu.matmul %3, %2, %cst_5 {dimension_numbers = #tpu.dot_dimension_numbers<[1], [0], [0], [1], [0, 0, 1, 1], [], []>, precision = #tpu.contract_precision<fp32>} : vector<32x64xf32>, vector<64x8xf32>, vector<32x8xf32> -> vector<32x8xf32>
    %c0_6 = arith.constant 0 : index
    %c0_7 = arith.constant 0 : index
    %5 = vector.load %arg4[%c0_6, %c0_7] : memref<32x8xf32, #tpu.memory_space<vmem>>, vector<32x8xf32>
    tpu.vector_store %arg4[%c0_6, %c0_7], %4 {strides = array<i32>} : memref<32x8xf32, #tpu.memory_space<vmem>>, vector<32x8xf32>,
    return
  }
  func.func @transform_0(%arg0: i32) -> (i32, i32) {
    %c0_i32 = arith.constant 0 : i32
    %c0_i32_0 = arith.constant 0 : i32
    return %arg0, %c0_i32 : i32, i32
  }
  func.func @transform_1(%arg0: i32) -> (i32, i32) {
    %c0_i32 = arith.constant 0 : i32
    %c0_i32_0 = arith.constant 0 : i32
    %c0_i32_1 = arith.constant 0 : i32
    return %c0_i32, %c0_i32_0 : i32, i32
  }
  func.func @transform_2(%arg0: i32) -> (i32, i32) {
    %c0_i32 = arith.constant 0 : i32
    %c0_i32_0 = arith.constant 0 : i32
    %c0_i32_1 = arith.constant 0 : i32
    return %c0_i32, %c0_i32_0 : i32, i32
  }
  func.func @transform_3(%arg0: i32) -> (i32, i32) {
    %c0_i32 = arith.constant 0 : i32
    %c0_i32_0 = arith.constant 0 : i32
    return %arg0, %c0_i32 : i32, i32
  }
}

</mosaic_0001>

<llo_original>
// kernel: tpu_custom_call.1
$region0: #{tpu_custom_call.1}
  #allocation0 [shape = 'u32[]', space=smem, size = 0x4, offset = 0x4, fixed_abs, tag = 'smem constant byte address 0x4 - core index']
  #allocation1 [shape = 'u32[144,128]{1,0:T(1,128)}', space=vmem, size = 0x12000, scoped, tag = 'internal scratch']
  %s0 = inlined_call_operand.vmem [shape: f32[128,16], index: 0, kind: input, shape index: {}]
  %s1 = inlined_call_operand.vmem [shape: f32[32,64], index: 1, kind: input, shape index: {}]
  %s2 = inlined_call_operand.vmem [shape: f32[16,8], index: 2, kind: input, shape index: {}]
  %s3 = inlined_call_operand.vmem [shape: f32[64,8], index: 3, kind: output, shape index: {}]
  %s4 = sld [smem:[#allocation0]]
  $region45: #{tpu_custom_call.1} parent=0
    _
  %s6 = ssub.s32 1, %s4
  %s7 = scalar_select 0, %s6, %s4
  loop: start=0, step=1, limit=4
  $region2: #{tpu_custom_call.1} parent=0 // loop_pre_header
    _
  $region3: #{tpu_custom_call.1} parent=0 // loop_header
    %s9 = sphi 0, %s13
    %p10 = scmp.ge.s32.totalorder %s9, 4
    %s19 = sphi 0, %s21
    %s22 = sphi 0, %s19
    %s23 = sphi 0, %s22
    %s39 = sphi 0, %s23
    %s43 = sphi 0, %s43
    %s45 = sphi 0, %s43
    %s46 = sphi 0, %s45
    %s60 = sphi 0, %s46
    %s64 = sphi 0, %s64
    %s66 = sphi 0, %s64
    %s67 = sphi 0, %s66
    %s81 = sphi 0, %s67
    %s87 = sphi 0, %s89
    %s90 = sphi 0, %s87
    %s91 = sphi 0, %s90
    %s107 = sphi 0, %s91
  $region4: #{tpu_custom_call.1} parent=0 // loop_header_branch
    %12 = sbr.rel (%p10) target = $region8
  $region5: #{tpu_custom_call.1} parent=0 // loop_body
    %s14 = ssub.s32 %s9, 1
    %s15 = ssub.s32 %s9, 2
    %s16 = sadd.s32 %s9, 1
    %s17 = ssub.s32 %s9, %s16
    %p18 = scmp.eq.s32.totalorder %s17, 0
    %s20 = sadd.s32 %s19, 1
    %s21 = scalar_select %p18, %s19, %s20
    %p24 = pneg %p18
    %p25 = scmp.eq.s32.totalorder %s9, 1
    %p26 = por %p24, %p25
    %p27 = scmp.ne.s32.totalorder %s19, %s22
    %p28 = scmp.eq.s32.totalorder %s9, 0
    %p29 = por %p27, %p28
    %p30 = scmp.ne.s32.totalorder %s19, %s22
    %p31 = scmp.eq.s32.totalorder %s14, 1
    %p32 = por %p30, %p31
    %p33 = scmp.ne.s32.totalorder %s22, %s23
    %p34 = scmp.eq.s32.totalorder %s14, 0
    %p35 = por %p33, %p34
    %p36 = scmp.ne.s32.totalorder %s22, %s23
    %p37 = scmp.eq.s32.totalorder %s15, 1
    %p38 = por %p36, %p37
    %p40 = scmp.ne.s32.totalorder %s23, %s39
    %p41 = scmp.eq.s32.totalorder %s15, 0
    %p42 = por %p40, %p41
    %s44 = sadd.s32 %s43, 1
    %p47 = scmp.eq.s32.totalorder %s9, 1
    %p48 = scmp.ne.s32.totalorder %s43, %s45
    %p49 = scmp.eq.s32.totalorder %s9, 0
    %p50 = por %p48, %p49
    %p51 = scmp.ne.s32.totalorder %s43, %s45
    %p52 = scmp.eq.s32.totalorder %s14, 1
    %p53 = por %p51, %p52
    %p54 = scmp.ne.s32.totalorder %s45, %s46
    %p55 = scmp.eq.s32.totalorder %s14, 0
    %p56 = por %p54, %p55
    %p57 = scmp.ne.s32.totalorder %s45, %s46
    %p58 = scmp.eq.s32.totalorder %s15, 1
    %p59 = por %p57, %p58
    %p61 = scmp.ne.s32.totalorder %s46, %s60
    %p62 = scmp.eq.s32.totalorder %s15, 0
    %p63 = por %p61, %p62
    %s65 = sadd.s32 %s64, 1
    %p68 = scmp.eq.s32.totalorder %s9, 1
    %p69 = scmp.ne.s32.totalorder %s64, %s66
    %p70 = scmp.eq.s32.totalorder %s9, 0
    %p71 = por %p69, %p70
    %p72 = scmp.ne.s32.totalorder %s64, %s66
    %p73 = scmp.eq.s32.totalorder %s14, 1
    %p74 = por %p72, %p73
    %p75 = scmp.ne.s32.totalorder %s66, %s67
    %p76 = scmp.eq.s32.totalorder %s14, 0
    %p77 = por %p75, %p76
    %p78 = scmp.ne.s32.totalorder %s66, %s67
    %p79 = scmp.eq.s32.totalorder %s15, 1
    %p80 = por %p78, %p79
    %p82 = scmp.ne.s32.totalorder %s67, %s81
    %p83 = scmp.eq.s32.totalorder %s15, 0
    %p84 = por %p82, %p83
    %s85 = ssub.s32 %s9, %s16
    %p86 = scmp.eq.s32.totalorder %s85, 0
    %s88 = sadd.s32 %s87, 1
    %s89 = scalar_select %p86, %s87, %s88
    %p92 = pneg %p86
    %p93 = scmp.eq.s32.totalorder %s9, 1
    %p94 = por %p92, %p93
    %p95 = scmp.ne.s32.totalorder %s87, %s90
    %p96 = scmp.eq.s32.totalorder %s9, 0
    %p97 = por %p95, %p96
    %p98 = scmp.ne.s32.totalorder %s87, %s90
    %p99 = scmp.eq.s32.totalorder %s14, 1
    %p100 = por %p98, %p99
    %p101 = scmp.ne.s32.totalorder %s90, %s91
    %p102 = scmp.eq.s32.totalorder %s14, 0
    %p103 = por %p101, %p102
    %p104 = scmp.ne.s32.totalorder %s90, %s91
    %p105 = scmp.eq.s32.totalorder %s15, 1
    %p106 = por %p104, %p105
    %p108 = scmp.ne.s32.totalorder %s91, %s107
    %p109 = scmp.eq.s32.totalorder %s15, 0
    %p110 = por %p108, %p109
    %p111 = scmp.le.s32.totalorder 1, %s9
    %p112 = scmp.lt.s32.totalorder %s9, 3
    %p113 = pnand %p111, %p112
    %p114 = pneg %p113
    // Predicated region
    $region9: #{tpu_custom_call.1} parent=5 // pred_check
      _
    $region10: #{tpu_custom_call.1} parent=5 // pred_check_branch
      %116 = sbr.rel (%p113) target = $region12
    $region11: #{tpu_custom_call.1} parent=5 // pred_region
      %s117 = ssub.s32 %s9, 1
      // Predicated region
      $region13: #{tpu_custom_call.1} parent=11 // pred_check
        %p118 = pneg %p56
      $region14: #{tpu_custom_call.1} parent=11 // pred_check_branch
        %120 = sbr.rel (%p118) target = $region16
      $region15: #{tpu_custom_call.1} parent=11 // pred_region
        _
      $region16: #{tpu_custom_call.1} parent=11 // pred_fallthru
        _
      // Predicated region
      $region17: #{tpu_custom_call.1} parent=11 // pred_check
        %p121 = pneg %p77
      $region18: #{tpu_custom_call.1} parent=11 // pred_check_branch
        %123 = sbr.rel (%p121) target = $region20
      $region19: #{tpu_custom_call.1} parent=11 // pred_region
        _
      $region20: #{tpu_custom_call.1} parent=11 // pred_fallthru
        _
    $region12: #{tpu_custom_call.1} parent=5 // pred_fallthru
      _
    %p124 = scmp.lt.s32.totalorder %s9, 2
    // Predicated region
    $region21: #{tpu_custom_call.1} parent=5 // pred_check
      %p125 = pneg %p124
    $region22: #{tpu_custom_call.1} parent=5 // pred_check_branch
      %127 = sbr.rel (%p125) target = $region24
    $region23: #{tpu_custom_call.1} parent=5 // pred_region
      // Predicated region
      $region25: #{tpu_custom_call.1} parent=23 // pred_check
        %p128 = pneg %p29
      $region26: #{tpu_custom_call.1} parent=23 // pred_check_branch
        %130 = sbr.rel (%p128) target = $region28
      $region27: #{tpu_custom_call.1} parent=23 // pred_region
        %s131 = smul.u32 8, %s9
        %p132 = scmp.lt.s32.totalorder %s131, 15
        %s133 = scalar_select %p132, %s131, 15
        %s134 = smul.addr %s133, 8
        %s135 = scalar_lea.vmem %s0, %s134
        %s136 = smul.u32 8, %s9
      $region28: #{tpu_custom_call.1} parent=23 // pred_fallthru
        _
    $region24: #{tpu_custom_call.1} parent=5 // pred_fallthru
      _
    %p137 = scmp.le.s32.totalorder 1, %s9
    %p138 = scmp.lt.s32.totalorder %s9, 3
    %p139 = pnand %p137, %p138
    %p140 = pneg %p139
    // Predicated region
    $region29: #{tpu_custom_call.1} parent=5 // pred_check
      _
    $region30: #{tpu_custom_call.1} parent=5 // pred_check_branch
      %142 = sbr.rel (%p139) target = $region32
    $region31: #{tpu_custom_call.1} parent=5 // pred_region
      %s143 = ssub.s32 %s9, 1
      %s144 = smul.u32 8, %s14
      %p145 = scmp.lt.s32.totalorder %s144, 15
      %s146 = scalar_select %p145, %s144, 15
      %s147 = smul.addr %s146, 8
      %s148 = scalar_lea.vmem %s0, %s147
      %p149 = pneg %p35
      %p150 = pneg %p32
      %p151 = pneg %p56
      %p152 = pneg %p53
      %p153 = pneg %p77
      %p154 = pneg %p74
      %p155 = pneg %p103
      %p156 = pneg %p100
      %s157 = smul.u32 4, %s14
      %p158 = scmp.lt.s32.totalorder %s157, 7
      %s159 = scalar_select %p158, %s157, 7
      %s160 = smul.addr %s159, 8
      %s161 = scalar_lea.vmem %s3, %s160
      %s162 = smul.u32 8, %s14
      %p163 = scmp.lt.s32.totalorder %s162, 15
      %s164 = scalar_select %p163, %s162, 15
      %s165 = smul.addr %s164, 8
      %s166 = scalar_lea.vmem %s0, %s165
      %s167 = smul.u32 8, %s14
      %s168 = smul.u32 4, %s14
      %p169 = scmp.lt.s32.totalorder %s168, 7
      %s170 = scalar_select %p169, %s168, 7
      %s171 = smul.addr %s170, 8
      %s172 = scalar_lea.vmem %s3, %s171
      %s173 = smul.u32 4, %s14
      %v174 = vld [vmem:[%s166] sm:$0xff]
      %v175 = vld [vmem:[%s166 + $0x8] sm:$0xff]
      %v176 = vld [vmem:[%s166 + $0x10] sm:$0xff]
      %v177 = vld [vmem:[%s166 + $0x18] sm:$0xff]
      %v178 = vld [vmem:[%s166 + $0x20] sm:$0xff]
      %v179 = vld [vmem:[%s166 + $0x28] sm:$0xff]
      %v180 = vld [vmem:[%s166 + $0x30] sm:$0xff]
      %v181 = vld [vmem:[%s166 + $0x38] sm:$0xff]
      %v182 = vld [vmem:[%s2] sm:$0xff]
      %v183 = vld [vmem:[%s2 + $0x8] sm:$0xff]
      %vm184 = vcmask 130048
      %v186 = vsel %vm184, %v174, 0
      %v189 = vsel %vm184, %v175, 0
      %v192 = vsel %vm184, %v176, 0
      %v195 = vsel %vm184, %v177, 0
      %v198 = vsel %vm184, %v178, 0
      %v201 = vsel %vm184, %v179, 0
      %v204 = vsel %vm184, %v180, 0
      %v207 = vsel %vm184, %v181, 0
      %209 = vmatprep.subr.mxu0 0.0
      %v210 = vand.u32 %v182, 4294901760
      %211 = vmatpush1.msra.mxu0 %v210
      %212 = vmatprep.subr.mxu0 0.0
      %v213 = vand.u32 %v183, 4294901760
      %214 = vmatpush1.msra.mxu0 %v213
      %215 = vmatprep.subr.mxu0 0.0
      %216 = vmatpush1.msra.mxu0 0.0
      %217 = vmatprep.subr.mxu0 0.0
      %218 = vmatpush1.msra.mxu0 0.0
      %219 = vmatprep.subr.mxu0 0.0
      %220 = vmatpush1.msra.mxu0 0.0
      %221 = vmatprep.subr.mxu0 0.0
      %222 = vmatpush1.msra.mxu0 0.0
      %223 = vmatprep.subr.mxu0 0.0
      %224 = vmatpush1.msra.mxu0 0.0
      %225 = vmatprep.subr.mxu0 0.0
      %226 = vmatpush1.msra.mxu0 0.0
      %227 = vmatprep.subr.mxu0 0.0
      %228 = vmatpush1.msra.mxu0 0.0
      %229 = vmatprep.subr.mxu0 0.0
      %230 = vmatpush1.msra.mxu0 0.0
      %231 = vmatprep.subr.mxu0 0.0
      %232 = vmatpush1.msra.mxu0 0.0
      %233 = vmatprep.subr.mxu0 0.0
      %234 = vmatpush1.msra.mxu0 0.0
      %235 = vmatprep.subr.mxu0 0.0
      %236 = vmatpush1.msra.mxu0 0.0
      %237 = vmatprep.subr.mxu0 0.0
      %238 = vmatpush1.msra.mxu0 0.0
      %239 = vmatprep.subr.mxu0 0.0
      %240 = vmatpush1.msra.mxu0 0.0
      %241 = vmatprep.subr.mxu0 0.0
      %242 = vmatpush1.msra.mxu0 0.0
      %243 = vmatprep.subr.mxu0 0.0
      %244 = vmatpush1.msra.mxu0 0.0
      %245 = vmatprep.subr.mxu0 0.0
      %246 = vmatpush1.msra.mxu0 0.0
      %247 = vmatprep.subr.mxu0 0.0
      %248 = vmatpush1.msra.mxu0 0.0
      %249 = vmatprep.subr.mxu0 0.0
      %250 = vmatpush1.msra.mxu0 0.0
      %251 = vmatprep.subr.mxu0 0.0
      %252 = vmatpush1.msra.mxu0 0.0
      %253 = vmatprep.subr.mxu0 0.0
      %254 = vmatpush1.msra.mxu0 0.0
      %255 = vmatprep.subr.mxu0 0.0
      %256 = vmatpush1.msra.mxu0 0.0
      %257 = vmatprep.subr.mxu0 0.0
      %258 = vmatpush1.msra.mxu0 0.0
      %259 = vmatprep.subr.mxu0 0.0
      %260 = vmatpush1.msra.mxu0 0.0
      %261 = vmatprep.subr.mxu0 0.0
      %262 = vmatpush1.msra.mxu0 0.0
      %263 = vmatprep.subr.mxu0 0.0
      %264 = vmatpush1.msra.mxu0 0.0
      %265 = vmatprep.subr.mxu0 0.0
      %266 = vmatpush1.msra.mxu0 0.0
      %267 = vmatprep.subr.mxu0 0.0
      %268 = vmatpush1.msra.mxu0 0.0
      %269 = vmatprep.subr.mxu0 0.0
      %270 = vmatpush1.msra.mxu0 0.0
      %271 = vmatprep.subr.mxu0 0.0
      %272 = vmatpush1.msra.mxu0 0.0
      %273 = vmatprep.subr.mxu0 0.0
      %274 = vmatpush1.msra.mxu0 0.0
      %275 = vmatprep.mubr.f32.mxu0 0.0
      %v276 = vand.u32 %v186, 4294901760
      %v277 = vsub.f32 %v186, %v276
      %v278 = vand.u32 %v277, 4294901760
      %v279 = vsub.f32 %v277, %v278
      %v280 = vand.u32 %v279, 4294901760
      %281 = vmatmul.mubr.f32.gmra.mrb[0].mxu0 %v280
      %v282 = vpop.f32.mrb[0].mxu0
      %v283 = vadd.f32 0.0, %v282
      %v284 = vpop.f32.mrb[0].mxu0
      %285 = vmatprep.mubr.f32.mxu0 0.0
      %v286 = vand.u32 %v189, 4294901760
      %v287 = vsub.f32 %v189, %v286
      %v288 = vand.u32 %v287, 4294901760
      %v289 = vsub.f32 %v287, %v288
      %v290 = vand.u32 %v289, 4294901760
      %291 = vmatmul.mubr.f32.gmra.mrb[0].mxu0 %v290
      %v292 = vpop.f32.mrb[0].mxu0
      %v293 = vadd.f32 0.0, %v292
      %v294 = vpop.f32.mrb[0].mxu0
      %295 = vmatprep.mubr.f32.mxu0 0.0
      %v296 = vand.u32 %v192, 4294901760
      %v297 = vsub.f32 %v192, %v296
      %v298 = vand.u32 %v297, 4294901760
      %v299 = vsub.f32 %v297, %v298
      %v300 = vand.u32 %v299, 4294901760
      %301 = vmatmul.mubr.f32.gmra.mrb[0].mxu0 %v300
      %v302 = vpop.f32.mrb[0].mxu0
      %v303 = vadd.f32 0.0, %v302
      %v304 = vpop.f32.mrb[0].mxu0
      %305 = vmatprep.mubr.f32.mxu0 0.0
      %v306 = vand.u32 %v195, 4294901760
      %v307 = vsub.f32 %v195, %v306
      %v308 = vand.u32 %v307, 4294901760
      %v309 = vsub.f32 %v307, %v308
      %v310 = vand.u32 %v309, 4294901760
      %311 = vmatmul.mubr.f32.gmra.mrb[0].mxu0 %v310
      %v312 = vpop.f32.mrb[0].mxu0
      %v313 = vadd.f32 0.0, %v312
      %v314 = vpop.f32.mrb[0].mxu0
      %315 = vmatprep.mubr.f32.mxu0 0.0
      %v316 = vand.u32 %v198, 4294901760
      %v317 = vsub.f32 %v198, %v316
      %v318 = vand.u32 %v317, 4294901760
      %v319 = vsub.f32 %v317, %v318
      %v320 = vand.u32 %v319, 4294901760
      %321 = vmatmul.mubr.f32.gmra.mrb[0].mxu0 %v320
      %v322 = vpop.f32.mrb[0].mxu0
      %v323 = vadd.f32 0.0, %v322
      %v324 = vpop.f32.mrb[0].mxu0
      %325 = vmatprep.mubr.f32.mxu0 0.0
      %v326 = vand.u32 %v201, 4294901760
      %v327 = vsub.f32 %v201, %v326
      %v328 = vand.u32 %v327, 4294901760
      %v329 = vsub.f32 %v327, %v328
      %v330 = vand.u32 %v329, 4294901760
      %331 = vmatmul.mubr.f32.gmra.mrb[0].mxu0 %v330
      %v332 = vpop.f32.mrb[0].mxu0
      %v333 = vadd.f32 0.0, %v332
      %v334 = vpop.f32.mrb[0].mxu0
      %335 = vmatprep.mubr.f32.mxu0 0.0
      %v336 = vand.u32 %v204, 4294901760
      %v337 = vsub.f32 %v204, %v336
      %v338 = vand.u32 %v337, 4294901760
      %v339 = vsub.f32 %v337, %v338
      %v340 = vand.u32 %v339, 4294901760
      %341 = vmatmul.mubr.f32.gmra.mrb[0].mxu0 %v340
      %v342 = vpop.f32.mrb[0].mxu0
      %v343 = vadd.f32 0.0, %v342
      %v344 = vpop.f32.mrb[0].mxu0
      %345 = vmatprep.mubr.f32.mxu0 0.0
      %v346 = vand.u32 %v207, 4294901760
      %v347 = vsub.f32 %v207, %v346
      %v348 = vand.u32 %v347, 4294901760
      %v349 = vsub.f32 %v347, %v348
      %v350 = vand.u32 %v349, 4294901760
      %351 = vmatmul.mubr.f32.gmra.mrb[0].mxu0 %v350
      %v352 = vpop.f32.mrb[0].mxu0
      %v353 = vadd.f32 0.0, %v352
      %v354 = vpop.f32.mrb[0].mxu0
      %355 = vdwg.mxu0
      %356 = vmatprep.subr.mxu0 0.0
      %v357 = vand.u32 %v182, 4294901760
      %v358 = vsub.f32 %v182, %v357
      %v359 = vand.u32 %v358, 4294901760
      %v360 = vsub.f32 %v358, %v359
      %v361 = vand.u32 %v360, 4294901760
      %362 = vmatpush1.msra.mxu0 %v361
      %363 = vmatprep.subr.mxu0 0.0
      %v364 = vand.u32 %v183, 4294901760
      %v365 = vsub.f32 %v183, %v364
      %v366 = vand.u32 %v365, 4294901760
      %v367 = vsub.f32 %v365, %v366
      %v368 = vand.u32 %v367, 4294901760
      %369 = vmatpush1.msra.mxu0 %v368
      %370 = vmatprep.subr.mxu0 0.0
      %371 = vmatpush1.msra.mxu0 0.0
      %372 = vmatprep.subr.mxu0 0.0
      %373 = vmatpush1.msra.mxu0 0.0
      %374 = vmatprep.subr.mxu0 0.0
      %375 = vmatpush1.msra.mxu0 0.0
      %376 = vmatprep.subr.mxu0 0.0
      %377 = vmatpush1.msra.mxu0 0.0
      %378 = vmatprep.subr.mxu0 0.0
      %379 = vmatpush1.msra.mxu0 0.0
      %380 = vmatprep.subr.mxu0 0.0
      %381 = vmatpush1.msra.mxu0 0.0
      %382 = vmatprep.subr.mxu0 0.0
      %383 = vmatpush1.msra.mxu0 0.0
      %384 = vmatprep.subr.mxu0 0.0
      %385 = vmatpush1.msra.mxu0 0.0
      %386 = vmatprep.subr.mxu0 0.0
      %387 = vmatpush1.msra.mxu0 0.0
      %388 = vmatprep.subr.mxu0 0.0
      %389 = vmatpush1.msra.mxu0 0.0
      %390 = vmatprep.subr.mxu0 0.0
      %391 = vmatpush1.msra.mxu0 0.0
      %392 = vmatprep.subr.mxu0 0.0
      %393 = vmatpush1.msra.mxu0 0.0
      %394 = vmatprep.subr.mxu0 0.0
      %395 = vmatpush1.msra.mxu0 0.0
      %396 = vmatprep.subr.mxu0 0.0
      %397 = vmatpush1.msra.mxu0 0.0
      %398 = vmatprep.subr.mxu0 0.0
      %399 = vmatpush1.msra.mxu0 0.0
      %400 = vmatprep.subr.mxu0 0.0
      %401 = vmatpush1.msra.mxu0 0.0
      %402 = vmatprep.subr.mxu0 0.0
      %403 = vmatpush1.msra.mxu0 0.0
      %404 = vmatprep.subr.mxu0 0.0
      %405 = vmatpush1.msra.mxu0 0.0
      %406 = vmatprep.subr.mxu0 0.0
      %407 = vmatpush1.msra.mxu0 0.0
      %408 = vmatprep.subr.mxu0 0.0
      %409 = vmatpush1.msra.mxu0 0.0
      %410 = vmatprep.subr.mxu0 0.0
      %411 = vmatpush1.msra.mxu0 0.0
      %412 = vmatprep.subr.mxu0 0.0
      %413 = vmatpush1.msra.mxu0 0.0
      %414 = vmatprep.subr.mxu0 0.0
      %415 = vmatpush1.msra.mxu0 0.0
      %416 = vmatprep.subr.mxu0 0.0
      %417 = vmatpush1.msra.mxu0 0.0
      %418 = vmatprep.subr.mxu0 0.0
      %419 = vmatpush1.msra.mxu0 0.0
      %420 = vmatprep.subr.mxu0 0.0
      %421 = vmatpush1.msra.mxu0 0.0
      %422 = vmatprep.subr.mxu0 0.0
      %423 = vmatpush1.msra.mxu0 0.0
      %424 = vmatprep.subr.mxu0 0.0
      %425 = vmatpush1.msra.mxu0 0.0
      %426 = vmatprep.subr.mxu0 0.0
      %427 = vmatpush1.msra.mxu0 0.0
      %428 = vmatprep.subr.mxu0 0.0
      %429 = vmatpush1.msra.mxu0 0.0
      %430 = vmatprep.mubr.f32.mxu0 0.0
      %v431 = vand.u32 %v186, 4294901760
      %432 = vmatmul.mubr.f32.gmra.mrb[0].mxu0 %v431
      %v433 = vpop.f32.mrb[0].mxu0
      %v434 = vadd.f32 %v283, %v433
      %v435 = vpop.f32.mrb[0].mxu0
      %436 = vmatprep.mubr.f32.mxu0 0.0
      %v437 = vand.u32 %v189, 4294901760
      %438 = vmatmul.mubr.f32.gmra.mrb[0].mxu0 %v437
      %v439 = vpop.f32.mrb[0].mxu0
      %v440 = vadd.f32 %v293, %v439
      %v441 = vpop.f32.mrb[0].mxu0
      %442 = vmatprep.mubr.f32.mxu0 0.0
      %v443 = vand.u32 %v192, 4294901760
      %444 = vmatmul.mubr.f32.gmra.mrb[0].mxu0 %v443
      %v445 = vpop.f32.mrb[0].mxu0
      %v446 = vadd.f32 %v303, %v445
      %v447 = vpop.f32.mrb[0].mxu0
      %448 = vmatprep.mubr.f32.mxu0 0.0
      %v449 = vand.u32 %v195, 4294901760
      %450 = vmatmul.mubr.f32.gmra.mrb[0].mxu0 %v449
      %v451 = vpop.f32.mrb[0].mxu0
      %v452 = vadd.f32 %v313, %v451
      %v453 = vpop.f32.mrb[0].mxu0
      %454 = vmatprep.mubr.f32.mxu0 0.0
      %v455 = vand.u32 %v198, 4294901760
      %456 = vmatmul.mubr.f32.gmra.mrb[0].mxu0 %v455
      %v457 = vpop.f32.mrb[0].mxu0
      %v458 = vadd.f32 %v323, %v457
      %v459 = vpop.f32.mrb[0].mxu0
      %460 = vmatprep.mubr.f32.mxu0 0.0
      %v461 = vand.u32 %v201, 4294901760
      %462 = vmatmul.mubr.f32.gmra.mrb[0].mxu0 %v461
      %v463 = vpop.f32.mrb[0].mxu0
      %v464 = vadd.f32 %v333, %v463
      %v465 = vpop.f32.mrb[0].mxu0
      %466 = vmatprep.mubr.f32.mxu0 0.0
      %v467 = vand.u32 %v204, 4294901760
      %468 = vmatmul.mubr.f32.gmra.mrb[0].mxu0 %v467
      %v469 = vpop.f32.mrb[0].mxu0
      %v470 = vadd.f32 %v343, %v469
      %v471 = vpop.f32.mrb[0].mxu0
      %472 = vmatprep.mubr.f32.mxu0 0.0
      %v473 = vand.u32 %v207, 4294901760
      %474 = vmatmul.mubr.f32.gmra.mrb[0].mxu0 %v473
      %v475 = vpop.f32.mrb[0].mxu0
      %v476 = vadd.f32 %v353, %v475
      %v477 = vpop.f32.mrb[0].mxu0
      %478 = vdwg.mxu0
      %479 = vmatprep.subr.mxu0 0.0
      %v480 = vand.u32 %v182, 4294901760
      %v481 = vsub.f32 %v182, %v480
      %482 = vmatpush1.msra.mxu0 %v481
      %483 = vmatprep.subr.mxu0 0.0
      %v484 = vand.u32 %v183, 4294901760
      %v485 = vsub.f32 %v183, %v484
      %486 = vmatpush1.msra.mxu0 %v485
      %487 = vmatprep.subr.mxu0 0.0
      %488 = vmatpush1.msra.mxu0 0.0
      %489 = vmatprep.subr.mxu0 0.0
      %490 = vmatpush1.msra.mxu0 0.0
      %491 = vmatprep.subr.mxu0 0.0
      %492 = vmatpush1.msra.mxu0 0.0
      %493 = vmatprep.subr.mxu0 0.0
      %494 = vmatpush1.msra.mxu0 0.0
      %495 = vmatprep.subr.mxu0 0.0
      %496 = vmatpush1.msra.mxu0 0.0
      %497 = vmatprep.subr.mxu0 0.0
      %498 = vmatpush1.msra.mxu0 0.0
      %499 = vmatprep.subr.mxu0 0.0
      %500 = vmatpush1.msra.mxu0 0.0
      %501 = vmatprep.subr.mxu0 0.0
      %502 = vmatpush1.msra.mxu0 0.0
      %503 = vmatprep.subr.mxu0 0.0
      %504 = vmatpush1.msra.mxu0 0.0
      %505 = vmatprep.subr.mxu0 0.0
      %506 = vmatpush1.msra.mxu0 0.0
      %507 = vmatprep.subr.mxu0 0.0
      %508 = vmatpush1.msra.mxu0 0.0
      %509 = vmatprep.subr.mxu0 0.0
      %510 = vmatpush1.msra.mxu0 0.0
      %511 = vmatprep.subr.mxu0 0.0
      %512 = vmatpush1.msra.mxu0 0.0
      %513 = vmatprep.subr.mxu0 0.0
      %514 = vmatpush1.msra.mxu0 0.0
      %515 = vmatprep.subr.mxu0 0.0
      %516 = vmatpush1.msra.mxu0 0.0
      %517 = vmatprep.subr.mxu0 0.0
      %518 = vmatpush1.msra.mxu0 0.0
      %519 = vmatprep.subr.mxu0 0.0
      %520 = vmatpush1.msra.mxu0 0.0
      %521 = vmatprep.subr.mxu0 0.0
      %522 = vmatpush1.msra.mxu0 0.0
      %523 = vmatprep.subr.mxu0 0.0
      %524 = vmatpush1.msra.mxu0 0.0
      %525 = vmatprep.subr.mxu0 0.0
      %526 = vmatpush1.msra.mxu0 0.0
      %527 = vmatprep.subr.mxu0 0.0
      %528 = vmatpush1.msra.mxu0 0.0
      %529 = vmatprep.subr.mxu0 0.0
      %530 = vmatpush1.msra.mxu0 0.0
      %531 = vmatprep.subr.mxu0 0.0
      %532 = vmatpush1.msra.mxu0 0.0
      %533 = vmatprep.subr.mxu0 0.0
      %534 = vmatpush1.msra.mxu0 0.0
      %535 = vmatprep.subr.mxu0 0.0
      %536 = vmatpush1.msra.mxu0 0.0
      %537 = vmatprep.subr.mxu0 0.0
      %538 = vmatpush1.msra.mxu0 0.0
      %539 = vmatprep.subr.mxu0 0.0
      %540 = vmatpush1.msra.mxu0 0.0
      %541 = vmatprep.subr.mxu0 0.0
      %542 = vmatpush1.msra.mxu0 0.0
      %543 = vmatprep.subr.mxu0 0.0
      %544 = vmatpush1.msra.mxu0 0.0
      %545 = vmatprep.subr.mxu0 0.0
      %546 = vmatpush1.msra.mxu0 0.0
      %547 = vmatprep.mubr.f32.mxu0 0.0
      %v548 = vand.u32 %v186, 4294901760
      %v549 = vsub.f32 %v186, %v548
      %550 = vmatmul.mubr.f32.gmra.mrb[0].mxu0 %v549
      %v551 = vpop.f32.mrb[0].mxu0
      %v552 = vadd.f32 %v434, %v551
      %v553 = vpop.f32.mrb[0].mxu0
      %554 = vmatprep.mubr.f32.mxu0 0.0
      %v555 = vand.u32 %v189, 4294901760
      %v556 = vsub.f32 %v189, %v555
      %557 = vmatmul.mubr.f32.gmra.mrb[0].mxu0 %v556
      %v558 = vpop.f32.mrb[0].mxu0
      %v559 = vadd.f32 %v440, %v558
      %v560 = vpop.f32.mrb[0].mxu0
      %561 = vmatprep.mubr.f32.mxu0 0.0
      %v562 = vand.u32 %v192, 4294901760
      %v563 = vsub.f32 %v192, %v562
      %564 = vmatmul.mubr.f32.gmra.mrb[0].mxu0 %v563
      %v565 = vpop.f32.mrb[0].mxu0
      %v566 = vadd.f32 %v446, %v565
      %v567 = vpop.f32.mrb[0].mxu0
      %568 = vmatprep.mubr.f32.mxu0 0.0
      %v569 = vand.u32 %v195, 4294901760
      %v570 = vsub.f32 %v195, %v569
      %571 = vmatmul.mubr.f32.gmra.mrb[0].mxu0 %v570
      %v572 = vpop.f32.mrb[0].mxu0
      %v573 = vadd.f32 %v452, %v572
      %v574 = vpop.f32.mrb[0].mxu0
      %575 = vmatprep.mubr.f32.mxu0 0.0
      %v576 = vand.u32 %v198, 4294901760
      %v577 = vsub.f32 %v198, %v576
      %578 = vmatmul.mubr.f32.gmra.mrb[0].mxu0 %v577
      %v579 = vpop.f32.mrb[0].mxu0
      %v580 = vadd.f32 %v458, %v579
      %v581 = vpop.f32.mrb[0].mxu0
      %582 = vmatprep.mubr.f32.mxu0 0.0
      %v583 = vand.u32 %v201, 4294901760
      %v584 = vsub.f32 %v201, %v583
      %585 = vmatmul.mubr.f32.gmra.mrb[0].mxu0 %v584
      %v586 = vpop.f32.mrb[0].mxu0
      %v587 = vadd.f32 %v464, %v586
      %v588 = vpop.f32.mrb[0].mxu0
      %589 = vmatprep.mubr.f32.mxu0 0.0
      %v590 = vand.u32 %v204, 4294901760
      %v591 = vsub.f32 %v204, %v590
      %592 = vmatmul.mubr.f32.gmra.mrb[0].mxu0 %v591
      %v593 = vpop.f32.mrb[0].mxu0
      %v594 = vadd.f32 %v470, %v593
      %v595 = vpop.f32.mrb[0].mxu0
      %596 = vmatprep.mubr.f32.mxu0 0.0
      %v597 = vand.u32 %v207, 4294901760
      %v598 = vsub.f32 %v207, %v597
      %599 = vmatmul.mubr.f32.gmra.mrb[0].mxu0 %v598
      %v600 = vpop.f32.mrb[0].mxu0
      %v601 = vadd.f32 %v476, %v600
      %v602 = vpop.f32.mrb[0].mxu0
      %603 = vdwg.mxu0
      %604 = vmatprep.subr.mxu0 0.0
      %v605 = vand.u32 %v182, 4294901760
      %606 = vmatpush1.msra.mxu0 %v605
      %607 = vmatprep.subr.mxu0 0.0
      %v608 = vand.u32 %v183, 4294901760
      %609 = vmatpush1.msra.mxu0 %v608
      %610 = vmatprep.subr.mxu0 0.0
      %611 = vmatpush1.msra.mxu0 0.0
      %612 = vmatprep.subr.mxu0 0.0
      %613 = vmatpush1.msra.mxu0 0.0
      %614 = vmatprep.subr.mxu0 0.0
      %615 = vmatpush1.msra.mxu0 0.0
      %616 = vmatprep.subr.mxu0 0.0
      %617 = vmatpush1.msra.mxu0 0.0
      %618 = vmatprep.subr.mxu0 0.0
      %619 = vmatpush1.msra.mxu0 0.0
      %620 = vmatprep.subr.mxu0 0.0
      %621 = vmatpush1.msra.mxu0 0.0
      %622 = vmatprep.subr.mxu0 0.0
      %623 = vmatpush1.msra.mxu0 0.0
      %624 = vmatprep.subr.mxu0 0.0
      %625 = vmatpush1.msra.mxu0 0.0
      %626 = vmatprep.subr.mxu0 0.0
      %627 = vmatpush1.msra.mxu0 0.0
      %628 = vmatprep.subr.mxu0 0.0
      %629 = vmatpush1.msra.mxu0 0.0
      %630 = vmatprep.subr.mxu0 0.0
      %631 = vmatpush1.msra.mxu0 0.0
      %632 = vmatprep.subr.mxu0 0.0
      %633 = vmatpush1.msra.mxu0 0.0
      %634 = vmatprep.subr.mxu0 0.0
      %635 = vmatpush1.msra.mxu0 0.0
      %636 = vmatprep.subr.mxu0 0.0
      %637 = vmatpush1.msra.mxu0 0.0
      %638 = vmatprep.subr.mxu0 0.0
      %639 = vmatpush1.msra.mxu0 0.0
      %640 = vmatprep.subr.mxu0 0.0
      %641 = vmatpush1.msra.mxu0 0.0
      %642 = vmatprep.subr.mxu0 0.0
      %643 = vmatpush1.msra.mxu0 0.0
      %644 = vmatprep.subr.mxu0 0.0
      %645 = vmatpush1.msra.mxu0 0.0
      %646 = vmatprep.subr.mxu0 0.0
      %647 = vmatpush1.msra.mxu0 0.0
      %648 = vmatprep.subr.mxu0 0.0
      %649 = vmatpush1.msra.mxu0 0.0
      %650 = vmatprep.subr.mxu0 0.0
      %651 = vmatpush1.msra.mxu0 0.0
      %652 = vmatprep.subr.mxu0 0.0
      %653 = vmatpush1.msra.mxu0 0.0
      %654 = vmatprep.subr.mxu0 0.0
      %655 = vmatpush1.msra.mxu0 0.0
      %656 = vmatprep.subr.mxu0 0.0
      %657 = vmatpush1.msra.mxu0 0.0
      %658 = vmatprep.subr.mxu0 0.0
      %659 = vmatpush1.msra.mxu0 0.0
      %660 = vmatprep.subr.mxu0 0.0
      %661 = vmatpush1.msra.mxu0 0.0
      %662 = vmatprep.subr.mxu0 0.0
      %663 = vmatpush1.msra.mxu0 0.0
      %664 = vmatprep.subr.mxu0 0.0
      %665 = vmatpush1.msra.mxu0 0.0
      %666 = vmatprep.subr.mxu0 0.0
      %667 = vmatpush1.msra.mxu0 0.0
      %668 = vmatprep.subr.mxu0 0.0
      %669 = vmatpush1.msra.mxu0 0.0
      %670 = vmatprep.mubr.f32.mxu0 0.0
      %v671 = vand.u32 %v186, 4294901760
      %v672 = vsub.f32 %v186, %v671
      %v673 = vand.u32 %v672, 4294901760
      %674 = vmatmul.mubr.f32.gmra.mrb[0].mxu0 %v673
      %v675 = vpop.f32.mrb[0].mxu0
      %v676 = vadd.f32 %v552, %v675
      %v677 = vpop.f32.mrb[0].mxu0
      %678 = vmatprep.mubr.f32.mxu0 0.0
      %v679 = vand.u32 %v189, 4294901760
      %v680 = vsub.f32 %v189, %v679
      %v681 = vand.u32 %v680, 4294901760
      %682 = vmatmul.mubr.f32.gmra.mrb[0].mxu0 %v681
      %v683 = vpop.f32.mrb[0].mxu0
      %v684 = vadd.f32 %v559, %v683
      %v685 = vpop.f32.mrb[0].mxu0
      %686 = vmatprep.mubr.f32.mxu0 0.0
      %v687 = vand.u32 %v192, 4294901760
      %v688 = vsub.f32 %v192, %v687
      %v689 = vand.u32 %v688, 4294901760
      %690 = vmatmul.mubr.f32.gmra.mrb[0].mxu0 %v689
      %v691 = vpop.f32.mrb[0].mxu0
      %v692 = vadd.f32 %v566, %v691
      %v693 = vpop.f32.mrb[0].mxu0
      %694 = vmatprep.mubr.f32.mxu0 0.0
      %v695 = vand.u32 %v195, 4294901760
      %v696 = vsub.f32 %v195, %v695
      %v697 = vand.u32 %v696, 4294901760
      %698 = vmatmul.mubr.f32.gmra.mrb[0].mxu0 %v697
      %v699 = vpop.f32.mrb[0].mxu0
      %v700 = vadd.f32 %v573, %v699
      %v701 = vpop.f32.mrb[0].mxu0
      %702 = vmatprep.mubr.f32.mxu0 0.0
      %v703 = vand.u32 %v198, 4294901760
      %v704 = vsub.f32 %v198, %v703
      %v705 = vand.u32 %v704, 4294901760
      %706 = vmatmul.mubr.f32.gmra.mrb[0].mxu0 %v705
      %v707 = vpop.f32.mrb[0].mxu0
      %v708 = vadd.f32 %v580, %v707
      %v709 = vpop.f32.mrb[0].mxu0
      %710 = vmatprep.mubr.f32.mxu0 0.0
      %v711 = vand.u32 %v201, 4294901760
      %v712 = vsub.f32 %v201, %v711
      %v713 = vand.u32 %v712, 4294901760
      %714 = vmatmul.mubr.f32.gmra.mrb[0].mxu0 %v713
      %v715 = vpop.f32.mrb[0].mxu0
      %v716 = vadd.f32 %v587, %v715
      %v717 = vpop.f32.mrb[0].mxu0
      %718 = vmatprep.mubr.f32.mxu0 0.0
      %v719 = vand.u32 %v204, 4294901760
      %v720 = vsub.f32 %v204, %v719
      %v721 = vand.u32 %v720, 4294901760
      %722 = vmatmul.mubr.f32.gmra.mrb[0].mxu0 %v721
      %v723 = vpop.f32.mrb[0].mxu0
      %v724 = vadd.f32 %v594, %v723
      %v725 = vpop.f32.mrb[0].mxu0
      %726 = vmatprep.mubr.f32.mxu0 0.0
      %v727 = vand.u32 %v207, 4294901760
      %v728 = vsub.f32 %v207, %v727
      %v729 = vand.u32 %v728, 4294901760
      %730 = vmatmul.mubr.f32.gmra.mrb[0].mxu0 %v729
      %v731 = vpop.f32.mrb[0].mxu0
      %v732 = vadd.f32 %v601, %v731
      %v733 = vpop.f32.mrb[0].mxu0
      %734 = vdwg.mxu0
      %735 = vmatprep.subr.mxu0 0.0
      %v736 = vand.u32 %v182, 4294901760
      %v737 = vsub.f32 %v182, %v736
      %v738 = vand.u32 %v737, 4294901760
      %739 = vmatpush1.msra.mxu0 %v738
      %740 = vmatprep.subr.mxu0 0.0
      %v741 = vand.u32 %v183, 4294901760
      %v742 = vsub.f32 %v183, %v741
      %v743 = vand.u32 %v742, 4294901760
      %744 = vmatpush1.msra.mxu0 %v743
      %745 = vmatprep.subr.mxu0 0.0
      %746 = vmatpush1.msra.mxu0 0.0
      %747 = vmatprep.subr.mxu0 0.0
      %748 = vmatpush1.msra.mxu0 0.0
      %749 = vmatprep.subr.mxu0 0.0
      %750 = vmatpush1.msra.mxu0 0.0
      %751 = vmatprep.subr.mxu0 0.0
      %752 = vmatpush1.msra.mxu0 0.0
      %753 = vmatprep.subr.mxu0 0.0
      %754 = vmatpush1.msra.mxu0 0.0
      %755 = vmatprep.subr.mxu0 0.0
      %756 = vmatpush1.msra.mxu0 0.0
      %757 = vmatprep.subr.mxu0 0.0
      %758 = vmatpush1.msra.mxu0 0.0
      %759 = vmatprep.subr.mxu0 0.0
      %760 = vmatpush1.msra.mxu0 0.0
      %761 = vmatprep.subr.mxu0 0.0
      %762 = vmatpush1.msra.mxu0 0.0
      %763 = vmatprep.subr.mxu0 0.0
      %764 = vmatpush1.msra.mxu0 0.0
      %765 = vmatprep.subr.mxu0 0.0
      %766 = vmatpush1.msra.mxu0 0.0
      %767 = vmatprep.subr.mxu0 0.0
      %768 = vmatpush1.msra.mxu0 0.0
      %769 = vmatprep.subr.mxu0 0.0
      %770 = vmatpush1.msra.mxu0 0.0
      %771 = vmatprep.subr.mxu0 0.0
      %772 = vmatpush1.msra.mxu0 0.0
      %773 = vmatprep.subr.mxu0 0.0
      %774 = vmatpush1.msra.mxu0 0.0
      %775 = vmatprep.subr.mxu0 0.0
      %776 = vmatpush1.msra.mxu0 0.0
      %777 = vmatprep.subr.mxu0 0.0
      %778 = vmatpush1.msra.mxu0 0.0
      %779 = vmatprep.subr.mxu0 0.0
      %780 = vmatpush1.msra.mxu0 0.0
      %781 = vmatprep.subr.mxu0 0.0
      %782 = vmatpush1.msra.mxu0 0.0
      %783 = vmatprep.subr.mxu0 0.0
      %784 = vmatpush1.msra.mxu0 0.0
      %785 = vmatprep.subr.mxu0 0.0
      %786 = vmatpush1.msra.mxu0 0.0
      %787 = vmatprep.subr.mxu0 0.0
      %788 = vmatpush1.msra.mxu0 0.0
      %789 = vmatprep.subr.mxu0 0.0
      %790 = vmatpush1.msra.mxu0 0.0
      %791 = vmatprep.subr.mxu0 0.0
      %792 = vmatpush1.msra.mxu0 0.0
      %793 = vmatprep.subr.mxu0 0.0
      %794 = vmatpush1.msra.mxu0 0.0
      %795 = vmatprep.subr.mxu0 0.0
      %796 = vmatpush1.msra.mxu0 0.0
      %797 = vmatprep.subr.mxu0 0.0
      %798 = vmatpush1.msra.mxu0 0.0
      %799 = vmatprep.subr.mxu0 0.0
      %800 = vmatpush1.msra.mxu0 0.0
      %801 = vmatprep.subr.mxu0 0.0
      %802 = vmatpush1.msra.mxu0 0.0
      %803 = vmatprep.subr.mxu0 0.0
      %804 = vmatpush1.msra.mxu0 0.0
      %805 = vmatprep.mubr.f32.mxu0 0.0
      %v806 = vand.u32 %v186, 4294901760
      %807 = vmatmul.mubr.f32.gmra.mrb[0].mxu0 %v806
      %v808 = vpop.f32.mrb[0].mxu0
      %v809 = vadd.f32 %v676, %v808
      %v810 = vpop.f32.mrb[0].mxu0
      %811 = vmatprep.mubr.f32.mxu0 0.0
      %v812 = vand.u32 %v189, 4294901760
      %813 = vmatmul.mubr.f32.gmra.mrb[0].mxu0 %v812
      %v814 = vpop.f32.mrb[0].mxu0
      %v815 = vadd.f32 %v684, %v814
      %v816 = vpop.f32.mrb[0].mxu0
      %817 = vmatprep.mubr.f32.mxu0 0.0
      %v818 = vand.u32 %v192, 4294901760
      %819 = vmatmul.mubr.f32.gmra.mrb[0].mxu0 %v818
      %v820 = vpop.f32.mrb[0].mxu0
      %v821 = vadd.f32 %v692, %v820
      %v822 = vpop.f32.mrb[0].mxu0
      %823 = vmatprep.mubr.f32.mxu0 0.0
      %v824 = vand.u32 %v195, 4294901760
      %825 = vmatmul.mubr.f32.gmra.mrb[0].mxu0 %v824
      %v826 = vpop.f32.mrb[0].mxu0
      %v827 = vadd.f32 %v700, %v826
      %v828 = vpop.f32.mrb[0].mxu0
      %829 = vmatprep.mubr.f32.mxu0 0.0
      %v830 = vand.u32 %v198, 4294901760
      %831 = vmatmul.mubr.f32.gmra.mrb[0].mxu0 %v830
      %v832 = vpop.f32.mrb[0].mxu0
      %v833 = vadd.f32 %v708, %v832
      %v834 = vpop.f32.mrb[0].mxu0
      %835 = vmatprep.mubr.f32.mxu0 0.0
      %v836 = vand.u32 %v201, 4294901760
      %837 = vmatmul.mubr.f32.gmra.mrb[0].mxu0 %v836
      %v838 = vpop.f32.mrb[0].mxu0
      %v839 = vadd.f32 %v716, %v838
      %v840 = vpop.f32.mrb[0].mxu0
      %841 = vmatprep.mubr.f32.mxu0 0.0
      %v842 = vand.u32 %v204, 4294901760
      %843 = vmatmul.mubr.f32.gmra.mrb[0].mxu0 %v842
      %v844 = vpop.f32.mrb[0].mxu0
      %v845 = vadd.f32 %v724, %v844
      %v846 = vpop.f32.mrb[0].mxu0
      %847 = vmatprep.mubr.f32.mxu0 0.0
      %v848 = vand.u32 %v207, 4294901760
      %849 = vmatmul.mubr.f32.gmra.mrb[0].mxu0 %v848
      %v850 = vpop.f32.mrb[0].mxu0
      %v851 = vadd.f32 %v732, %v850
      %v852 = vpop.f32.mrb[0].mxu0
      %853 = vdwg.mxu0
      %854 = vmatprep.subr.mxu0 0.0
      %v855 = vand.u32 %v182, 4294901760
      %856 = vmatpush1.msra.mxu0 %v855
      %857 = vmatprep.subr.mxu0 0.0
      %v858 = vand.u32 %v183, 4294901760
      %859 = vmatpush1.msra.mxu0 %v858
      %860 = vmatprep.subr.mxu0 0.0
      %861 = vmatpush1.msra.mxu0 0.0
      %862 = vmatprep.subr.mxu0 0.0
      %863 = vmatpush1.msra.mxu0 0.0
      %864 = vmatprep.subr.mxu0 0.0
      %865 = vmatpush1.msra.mxu0 0.0
      %866 = vmatprep.subr.mxu0 0.0
      %867 = vmatpush1.msra.mxu0 0.0
      %868 = vmatprep.subr.mxu0 0.0
      %869 = vmatpush1.msra.mxu0 0.0
      %870 = vmatprep.subr.mxu0 0.0
      %871 = vmatpush1.msra.mxu0 0.0
      %872 = vmatprep.subr.mxu0 0.0
      %873 = vmatpush1.msra.mxu0 0.0
      %874 = vmatprep.subr.mxu0 0.0
      %875 = vmatpush1.msra.mxu0 0.0
      %876 = vmatprep.subr.mxu0 0.0
      %877 = vmatpush1.msra.mxu0 0.0
      %878 = vmatprep.subr.mxu0 0.0
      %879 = vmatpush1.msra.mxu0 0.0
      %880 = vmatprep.subr.mxu0 0.0
      %881 = vmatpush1.msra.mxu0 0.0
      %882 = vmatprep.subr.mxu0 0.0
      %883 = vmatpush1.msra.mxu0 0.0
      %884 = vmatprep.subr.mxu0 0.0
      %885 = vmatpush1.msra.mxu0 0.0
      %886 = vmatprep.subr.mxu0 0.0
      %887 = vmatpush1.msra.mxu0 0.0
      %888 = vmatprep.subr.mxu0 0.0
      %889 = vmatpush1.msra.mxu0 0.0
      %890 = vmatprep.subr.mxu0 0.0
      %891 = vmatpush1.msra.mxu0 0.0
      %892 = vmatprep.subr.mxu0 0.0
      %893 = vmatpush1.msra.mxu0 0.0
      %894 = vmatprep.subr.mxu0 0.0
      %895 = vmatpush1.msra.mxu0 0.0
      %896 = vmatprep.subr.mxu0 0.0
      %897 = vmatpush1.msra.mxu0 0.0
      %898 = vmatprep.subr.mxu0 0.0
      %899 = vmatpush1.msra.mxu0 0.0
      %900 = vmatprep.subr.mxu0 0.0
      %901 = vmatpush1.msra.mxu0 0.0
      %902 = vmatprep.subr.mxu0 0.0
      %903 = vmatpush1.msra.mxu0 0.0
      %904 = vmatprep.subr.mxu0 0.0
      %905 = vmatpush1.msra.mxu0 0.0
      %906 = vmatprep.subr.mxu0 0.0
      %907 = vmatpush1.msra.mxu0 0.0
      %908 = vmatprep.subr.mxu0 0.0
      %909 = vmatpush1.msra.mxu0 0.0
      %910 = vmatprep.subr.mxu0 0.0
      %911 = vmatpush1.msra.mxu0 0.0
      %912 = vmatprep.subr.mxu0 0.0
      %913 = vmatpush1.msra.mxu0 0.0
      %914 = vmatprep.subr.mxu0 0.0
      %915 = vmatpush1.msra.mxu0 0.0
      %916 = vmatprep.subr.mxu0 0.0
      %917 = vmatpush1.msra.mxu0 0.0
      %918 = vmatprep.subr.mxu0 0.0
      %919 = vmatpush1.msra.mxu0 0.0
      %920 = vmatprep.mubr.f32.mxu0 0.0
      %v921 = vand.u32 %v186, 4294901760
      %922 = vmatmul.mubr.f32.gmra.mrb[0].mxu0 %v921
      %v923 = vpop.f32.mrb[0].mxu0
      %v924 = vadd.f32 %v809, %v923
      %v925 = vpop.f32.mrb[0].mxu0
      %926 = vmatprep.mubr.f32.mxu0 0.0
      %v927 = vand.u32 %v189, 4294901760
      %928 = vmatmul.mubr.f32.gmra.mrb[0].mxu0 %v927
      %v929 = vpop.f32.mrb[0].mxu0
      %v930 = vadd.f32 %v815, %v929
      %v931 = vpop.f32.mrb[0].mxu0
      %932 = vmatprep.mubr.f32.mxu0 0.0
      %v933 = vand.u32 %v192, 4294901760
      %934 = vmatmul.mubr.f32.gmra.mrb[0].mxu0 %v933
      %v935 = vpop.f32.mrb[0].mxu0
      %v936 = vadd.f32 %v821, %v935
      %v937 = vpop.f32.mrb[0].mxu0
      %938 = vmatprep.mubr.f32.mxu0 0.0
      %v939 = vand.u32 %v195, 4294901760
      %940 = vmatmul.mubr.f32.gmra.mrb[0].mxu0 %v939
      %v941 = vpop.f32.mrb[0].mxu0
      %v942 = vadd.f32 %v827, %v941
      %v943 = vpop.f32.mrb[0].mxu0
      %944 = vmatprep.mubr.f32.mxu0 0.0
      %v945 = vand.u32 %v198, 4294901760
      %946 = vmatmul.mubr.f32.gmra.mrb[0].mxu0 %v945
      %v947 = vpop.f32.mrb[0].mxu0
      %v948 = vadd.f32 %v833, %v947
      %v949 = vpop.f32.mrb[0].mxu0
      %950 = vmatprep.mubr.f32.mxu0 0.0
      %v951 = vand.u32 %v201, 4294901760
      %952 = vmatmul.mubr.f32.gmra.mrb[0].mxu0 %v951
      %v953 = vpop.f32.mrb[0].mxu0
      %v954 = vadd.f32 %v839, %v953
      %v955 = vpop.f32.mrb[0].mxu0
      %956 = vmatprep.mubr.f32.mxu0 0.0
      %v957 = vand.u32 %v204, 4294901760
      %958 = vmatmul.mubr.f32.gmra.mrb[0].mxu0 %v957
      %v959 = vpop.f32.mrb[0].mxu0
      %v960 = vadd.f32 %v845, %v959
      %v961 = vpop.f32.mrb[0].mxu0
      %962 = vmatprep.mubr.f32.mxu0 0.0
      %v963 = vand.u32 %v207, 4294901760
      %964 = vmatmul.mubr.f32.gmra.mrb[0].mxu0 %v963
      %v965 = vpop.f32.mrb[0].mxu0
      %v966 = vadd.f32 %v851, %v965
      %v967 = vpop.f32.mrb[0].mxu0
      %968 = vdwg.mxu0
      %v969 = vld [vmem:[%s1] sm:$0xff]
      %v970 = vld [vmem:[%s1 + $0x8] sm:$0xff]
      %v971 = vld [vmem:[%s1 + $0x10] sm:$0xff]
      %v972 = vld [vmem:[%s1 + $0x18] sm:$0xff]
      %vm973 = vcmask 523264
      %v975 = vsel %vm973, %v969, 0
      %v978 = vsel %vm973, %v970, 0
      %v981 = vsel %vm973, %v971, 0
      %v984 = vsel %vm973, %v972, 0
      %986 = vmatprep.subr.mxu0 0.0
      %v987 = vand.u32 %v924, 4294901760
      %988 = vmatpush1.msra.mxu0 %v987
      %989 = vmatprep.subr.mxu0 0.0
      %v990 = vand.u32 %v930, 4294901760
      %991 = vmatpush1.msra.mxu0 %v990
      %992 = vmatprep.subr.mxu0 0.0
      %v993 = vand.u32 %v936, 4294901760
      %994 = vmatpush1.msra.mxu0 %v993
      %995 = vmatprep.subr.mxu0 0.0
      %v996 = vand.u32 %v942, 4294901760
      %997 = vmatpush1.msra.mxu0 %v996
      %998 = vmatprep.subr.mxu0 0.0
      %v999 = vand.u32 %v948, 4294901760
      %1000 = vmatpush1.msra.mxu0 %v999
      %1001 = vmatprep.subr.mxu0 0.0
      %v1002 = vand.u32 %v954, 4294901760
      %1003 = vmatpush1.msra.mxu0 %v1002
      %1004 = vmatprep.subr.mxu0 0.0
      %v1005 = vand.u32 %v960, 4294901760
      %1006 = vmatpush1.msra.mxu0 %v1005
      %1007 = vmatprep.subr.mxu0 0.0
      %v1008 = vand.u32 %v966, 4294901760
      %1009 = vmatpush1.msra.mxu0 %v1008
      %1010 = vmatprep.subr.mxu0 0.0
      %1011 = vmatpush1.msra.mxu0 0.0
      %1012 = vmatprep.subr.mxu0 0.0
      %1013 = vmatpush1.msra.mxu0 0.0
      %1014 = vmatprep.subr.mxu0 0.0
      %1015 = vmatpush1.msra.mxu0 0.0
      %1016 = vmatprep.subr.mxu0 0.0
      %1017 = vmatpush1.msra.mxu0 0.0
      %1018 = vmatprep.subr.mxu0 0.0
      %1019 = vmatpush1.msra.mxu0 0.0
      %1020 = vmatprep.subr.mxu0 0.0
      %1021 = vmatpush1.msra.mxu0 0.0
      %1022 = vmatprep.subr.mxu0 0.0
      %1023 = vmatpush1.msra.mxu0 0.0
      %1024 = vmatprep.subr.mxu0 0.0
      %1025 = vmatpush1.msra.mxu0 0.0
      %1026 = vmatprep.subr.mxu0 0.0
      %1027 = vmatpush1.msra.mxu0 0.0
      %1028 = vmatprep.subr.mxu0 0.0
      %1029 = vmatpush1.msra.mxu0 0.0
      %1030 = vmatprep.subr.mxu0 0.0
      %1031 = vmatpush1.msra.mxu0 0.0
      %1032 = vmatprep.subr.mxu0 0.0
      %1033 = vmatpush1.msra.mxu0 0.0
      %1034 = vmatprep.subr.mxu0 0.0
      %1035 = vmatpush1.msra.mxu0 0.0
      %1036 = vmatprep.subr.mxu0 0.0
      %1037 = vmatpush1.msra.mxu0 0.0
      %1038 = vmatprep.subr.mxu0 0.0
      %1039 = vmatpush1.msra.mxu0 0.0
      %1040 = vmatprep.subr.mxu0 0.0
      %1041 = vmatpush1.msra.mxu0 0.0
      %1042 = vmatprep.subr.mxu0 0.0
      %1043 = vmatpush1.msra.mxu0 0.0
      %1044 = vmatprep.subr.mxu0 0.0
      %1045 = vmatpush1.msra.mxu0 0.0
      %1046 = vmatprep.subr.mxu0 0.0
      %1047 = vmatpush1.msra.mxu0 0.0
      %1048 = vmatprep.subr.mxu0 0.0
      %1049 = vmatpush1.msra.mxu0 0.0
      %1050 = vmatprep.subr.mxu0 0.0
      %1051 = vmatpush1.msra.mxu0 0.0
      %1052 = vmatprep.subr.mxu0 0.0
      %1053 = vmatpush1.msra.mxu0 0.0
      %1054 = vmatprep.subr.mxu0 0.0
      %1055 = vmatpush1.msra.mxu0 0.0
      %1056 = vmatprep.subr.mxu0 0.0
      %1057 = vmatpush1.msra.mxu0 0.0
      %1058 = vmatprep.mubr.f32.mxu0 0.0
      %v1059 = vand.u32 %v975, 4294901760
      %v1060 = vsub.f32 %v975, %v1059
      %v1061 = vand.u32 %v1060, 4294901760
      %v1062 = vsub.f32 %v1060, %v1061
      %v1063 = vand.u32 %v1062, 4294901760
      %1064 = vmatmul.mubr.f32.gmra.mrb[0].mxu0 %v1063
      %v1065 = vpop.f32.mrb[0].mxu0
      %v1066 = vadd.f32 0.0, %v1065
      %v1067 = vpop.f32.mrb[0].mxu0
      %1068 = vmatprep.mubr.f32.mxu0 0.0
      %v1069 = vand.u32 %v978, 4294901760
      %v1070 = vsub.f32 %v978, %v1069
      %v1071 = vand.u32 %v1070, 4294901760
      %v1072 = vsub.f32 %v1070, %v1071
      %v1073 = vand.u32 %v1072, 4294901760
      %1074 = vmatmul.mubr.f32.gmra.mrb[0].mxu0 %v1073
      %v1075 = vpop.f32.mrb[0].mxu0
      %v1076 = vadd.f32 0.0, %v1075
      %v1077 = vpop.f32.mrb[0].mxu0
      %1078 = vmatprep.mubr.f32.mxu0 0.0
      %v1079 = vand.u32 %v981, 4294901760
      %v1080 = vsub.f32 %v981, %v1079
      %v1081 = vand.u32 %v1080, 4294901760
      %v1082 = vsub.f32 %v1080, %v1081
      %v1083 = vand.u32 %v1082, 4294901760
      %1084 = vmatmul.mubr.f32.gmra.mrb[0].mxu0 %v1083
      %v1085 = vpop.f32.mrb[0].mxu0
      %v1086 = vadd.f32 0.0, %v1085
      %v1087 = vpop.f32.mrb[0].mxu0
      %1088 = vmatprep.mubr.f32.mxu0 0.0
      %v1089 = vand.u32 %v984, 4294901760
      %v1090 = vsub.f32 %v984, %v1089
      %v1091 = vand.u32 %v1090, 4294901760
      %v1092 = vsub.f32 %v1090, %v1091
      %v1093 = vand.u32 %v1092, 4294901760
      %1094 = vmatmul.mubr.f32.gmra.mrb[0].mxu0 %v1093
      %v1095 = vpop.f32.mrb[0].mxu0
      %v1096 = vadd.f32 0.0, %v1095
      %v1097 = vpop.f32.mrb[0].mxu0
      %1098 = vdwg.mxu0
      %1099 = vmatprep.subr.mxu0 0.0
      %v1100 = vand.u32 %v924, 4294901760
      %v1101 = vsub.f32 %v924, %v1100
      %v1102 = vand.u32 %v1101, 4294901760
      %v1103 = vsub.f32 %v1101, %v1102
      %v1104 = vand.u32 %v1103, 4294901760
      %1105 = vmatpush1.msra.mxu0 %v1104
      %1106 = vmatprep.subr.mxu0 0.0
      %v1107 = vand.u32 %v930, 4294901760
      %v1108 = vsub.f32 %v930, %v1107
      %v1109 = vand.u32 %v1108, 4294901760
      %v1110 = vsub.f32 %v1108, %v1109
      %v1111 = vand.u32 %v1110, 4294901760
      %1112 = vmatpush1.msra.mxu0 %v1111
      %1113 = vmatprep.subr.mxu0 0.0
      %v1114 = vand.u32 %v936, 4294901760
      %v1115 = vsub.f32 %v936, %v1114
      %v1116 = vand.u32 %v1115, 4294901760
      %v1117 = vsub.f32 %v1115, %v1116
      %v1118 = vand.u32 %v1117, 4294901760
      %1119 = vmatpush1.msra.mxu0 %v1118
      %1120 = vmatprep.subr.mxu0 0.0
      %v1121 = vand.u32 %v942, 4294901760
      %v1122 = vsub.f32 %v942, %v1121
      %v1123 = vand.u32 %v1122, 4294901760
      %v1124 = vsub.f32 %v1122, %v1123
      %v1125 = vand.u32 %v1124, 4294901760
      %1126 = vmatpush1.msra.mxu0 %v1125
      %1127 = vmatprep.subr.mxu0 0.0
      %v1128 = vand.u32 %v948, 4294901760
      %v1129 = vsub.f32 %v948, %v1128
      %v1130 = vand.u32 %v1129, 4294901760
      %v1131 = vsub.f32 %v1129, %v1130
      %v1132 = vand.u32 %v1131, 4294901760
      %1133 = vmatpush1.msra.mxu0 %v1132
      %1134 = vmatprep.subr.mxu0 0.0
      %v1135 = vand.u32 %v954, 4294901760
      %v1136 = vsub.f32 %v954, %v1135
      %v1137 = vand.u32 %v1136, 4294901760
      %v1138 = vsub.f32 %v1136, %v1137
      %v1139 = vand.u32 %v1138, 4294901760
      %1140 = vmatpush1.msra.mxu0 %v1139
      %1141 = vmatprep.subr.mxu0 0.0
      %v1142 = vand.u32 %v960, 4294901760
      %v1143 = vsub.f32 %v960, %v1142
      %v1144 = vand.u32 %v1143, 4294901760
      %v1145 = vsub.f32 %v1143, %v1144
      %v1146 = vand.u32 %v1145, 4294901760
      %1147 = vmatpush1.msra.mxu0 %v1146
      %1148 = vmatprep.subr.mxu0 0.0
      %v1149 = vand.u32 %v966, 4294901760
      %v1150 = vsub.f32 %v966, %v1149
      %v1151 = vand.u32 %v1150, 4294901760
      %v1152 = vsub.f32 %v1150, %v1151
      %v1153 = vand.u32 %v1152, 4294901760
      %1154 = vmatpush1.msra.mxu0 %v1153
      %1155 = vmatprep.subr.mxu0 0.0
      %1156 = vmatpush1.msra.mxu0 0.0
      %1157 = vmatprep.subr.mxu0 0.0
      %1158 = vmatpush1.msra.mxu0 0.0
      %1159 = vmatprep.subr.mxu0 0.0
      %1160 = vmatpush1.msra.mxu0 0.0
      %1161 = vmatprep.subr.mxu0 0.0
      %1162 = vmatpush1.msra.mxu0 0.0
      %1163 = vmatprep.subr.mxu0 0.0
      %1164 = vmatpush1.msra.mxu0 0.0
      %1165 = vmatprep.subr.mxu0 0.0
      %1166 = vmatpush1.msra.mxu0 0.0
      %1167 = vmatprep.subr.mxu0 0.0
      %1168 = vmatpush1.msra.mxu0 0.0
      %1169 = vmatprep.subr.mxu0 0.0
      %1170 = vmatpush1.msra.mxu0 0.0
      %1171 = vmatprep.subr.mxu0 0.0
      %1172 = vmatpush1.msra.mxu0 0.0
      %1173 = vmatprep.subr.mxu0 0.0
      %1174 = vmatpush1.msra.mxu0 0.0
      %1175 = vmatprep.subr.mxu0 0.0
      %1176 = vmatpush1.msra.mxu0 0.0
      %1177 = vmatprep.subr.mxu0 0.0
      %1178 = vmatpush1.msra.mxu0 0.0
      %1179 = vmatprep.subr.mxu0 0.0
      %1180 = vmatpush1.msra.mxu0 0.0
      %1181 = vmatprep.subr.mxu0 0.0
      %1182 = vmatpush1.msra.mxu0 0.0
      %1183 = vmatprep.subr.mxu0 0.0
      %1184 = vmatpush1.msra.mxu0 0.0
      %1185 = vmatprep.subr.mxu0 0.0
      %1186 = vmatpush1.msra.mxu0 0.0
      %1187 = vmatprep.subr.mxu0 0.0
      %1188 = vmatpush1.msra.mxu0 0.0
      %1189 = vmatprep.subr.mxu0 0.0
      %1190 = vmatpush1.msra.mxu0 0.0
      %1191 = vmatprep.subr.mxu0 0.0
      %1192 = vmatpush1.msra.mxu0 0.0
      %1193 = vmatprep.subr.mxu0 0.0
      %1194 = vmatpush1.msra.mxu0 0.0
      %1195 = vmatprep.subr.mxu0 0.0
      %1196 = vmatpush1.msra.mxu0 0.0
      %1197 = vmatprep.subr.mxu0 0.0
      %1198 = vmatpush1.msra.mxu0 0.0
      %1199 = vmatprep.subr.mxu0 0.0
      %1200 = vmatpush1.msra.mxu0 0.0
      %1201 = vmatprep.subr.mxu0 0.0
      %1202 = vmatpush1.msra.mxu0 0.0
      %1203 = vmatprep.mubr.f32.mxu0 0.0
      %v1204 = vand.u32 %v975, 4294901760
      %1205 = vmatmul.mubr.f32.gmra.mrb[0].mxu0 %v1204
      %v1206 = vpop.f32.mrb[0].mxu0
      %v1207 = vadd.f32 %v1066, %v1206
      %v1208 = vpop.f32.mrb[0].mxu0
      %1209 = vmatprep.mubr.f32.mxu0 0.0
      %v1210 = vand.u32 %v978, 4294901760
      %1211 = vmatmul.mubr.f32.gmra.mrb[0].mxu0 %v1210
      %v1212 = vpop.f32.mrb[0].mxu0
      %v1213 = vadd.f32 %v1076, %v1212
      %v1214 = vpop.f32.mrb[0].mxu0
      %1215 = vmatprep.mubr.f32.mxu0 0.0
      %v1216 = vand.u32 %v981, 4294901760
      %1217 = vmatmul.mubr.f32.gmra.mrb[0].mxu0 %v1216
      %v1218 = vpop.f32.mrb[0].mxu0
      %v1219 = vadd.f32 %v1086, %v1218
      %v1220 = vpop.f32.mrb[0].mxu0
      %1221 = vmatprep.mubr.f32.mxu0 0.0
      %v1222 = vand.u32 %v984, 4294901760
      %1223 = vmatmul.mubr.f32.gmra.mrb[0].mxu0 %v1222
      %v1224 = vpop.f32.mrb[0].mxu0
      %v1225 = vadd.f32 %v1096, %v1224
      %v1226 = vpop.f32.mrb[0].mxu0
      %1227 = vdwg.mxu0
      %1228 = vmatprep.subr.mxu0 0.0
      %v1229 = vand.u32 %v924, 4294901760
      %v1230 = vsub.f32 %v924, %v1229
      %1231 = vmatpush1.msra.mxu0 %v1230
      %1232 = vmatprep.subr.mxu0 0.0
      %v1233 = vand.u32 %v930, 4294901760
      %v1234 = vsub.f32 %v930, %v1233
      %1235 = vmatpush1.msra.mxu0 %v1234
      %1236 = vmatprep.subr.mxu0 0.0
      %v1237 = vand.u32 %v936, 4294901760
      %v1238 = vsub.f32 %v936, %v1237
      %1239 = vmatpush1.msra.mxu0 %v1238
      %1240 = vmatprep.subr.mxu0 0.0
      %v1241 = vand.u32 %v942, 4294901760
      %v1242 = vsub.f32 %v942, %v1241
      %1243 = vmatpush1.msra.mxu0 %v1242
      %1244 = vmatprep.subr.mxu0 0.0
      %v1245 = vand.u32 %v948, 4294901760
      %v1246 = vsub.f32 %v948, %v1245
      %1247 = vmatpush1.msra.mxu0 %v1246
      %1248 = vmatprep.subr.mxu0 0.0
      %v1249 = vand.u32 %v954, 4294901760
      %v1250 = vsub.f32 %v954, %v1249
      %1251 = vmatpush1.msra.mxu0 %v1250
      %1252 = vmatprep.subr.mxu0 0.0
      %v1253 = vand.u32 %v960, 4294901760
      %v1254 = vsub.f32 %v960, %v1253
      %1255 = vmatpush1.msra.mxu0 %v1254
      %1256 = vmatprep.subr.mxu0 0.0
      %v1257 = vand.u32 %v966, 4294901760
      %v1258 = vsub.f32 %v966, %v1257
      %1259 = vmatpush1.msra.mxu0 %v1258
      %1260 = vmatprep.subr.mxu0 0.0
      %1261 = vmatpush1.msra.mxu0 0.0
      %1262 = vmatprep.subr.mxu0 0.0
      %1263 = vmatpush1.msra.mxu0 0.0
      %1264 = vmatprep.subr.mxu0 0.0
      %1265 = vmatpush1.msra.mxu0 0.0
      %1266 = vmatprep.subr.mxu0 0.0
      %1267 = vmatpush1.msra.mxu0 0.0
      %1268 = vmatprep.subr.mxu0 0.0
      %1269 = vmatpush1.msra.mxu0 0.0
      %1270 = vmatprep.subr.mxu0 0.0
      %1271 = vmatpush1.msra.mxu0 0.0
      %1272 = vmatprep.subr.mxu0 0.0
      %1273 = vmatpush1.msra.mxu0 0.0
      %1274 = vmatprep.subr.mxu0 0.0
      %1275 = vmatpush1.msra.mxu0 0.0
      %1276 = vmatprep.subr.mxu0 0.0
      %1277 = vmatpush1.msra.mxu0 0.0
      %1278 = vmatprep.subr.mxu0 0.0
      %1279 = vmatpush1.msra.mxu0 0.0
      %1280 = vmatprep.subr.mxu0 0.0
      %1281 = vmatpush1.msra.mxu0 0.0
      %1282 = vmatprep.subr.mxu0 0.0
      %1283 = vmatpush1.msra.mxu0 0.0
      %1284 = vmatprep.subr.mxu0 0.0
      %1285 = vmatpush1.msra.mxu0 0.0
      %1286 = vmatprep.subr.mxu0 0.0
      %1287 = vmatpush1.msra.mxu0 0.0
      %1288 = vmatprep.subr.mxu0 0.0
      %1289 = vmatpush1.msra.mxu0 0.0
      %1290 = vmatprep.subr.mxu0 0.0
      %1291 = vmatpush1.msra.mxu0 0.0
      %1292 = vmatprep.subr.mxu0 0.0
      %1293 = vmatpush1.msra.mxu0 0.0
      %1294 = vmatprep.subr.mxu0 0.0
      %1295 = vmatpush1.msra.mxu0 0.0
      %1296 = vmatprep.subr.mxu0 0.0
      %1297 = vmatpush1.msra.mxu0 0.0
      %1298 = vmatprep.subr.mxu0 0.0
      %1299 = vmatpush1.msra.mxu0 0.0
      %1300 = vmatprep.subr.mxu0 0.0
      %1301 = vmatpush1.msra.mxu0 0.0
      %1302 = vmatprep.subr.mxu0 0.0
      %1303 = vmatpush1.msra.mxu0 0.0
      %1304 = vmatprep.subr.mxu0 0.0
      %1305 = vmatpush1.msra.mxu0 0.0
      %1306 = vmatprep.subr.mxu0 0.0
      %1307 = vmatpush1.msra.mxu0 0.0
      %1308 = vmatprep.mubr.f32.mxu0 0.0
      %v1309 = vand.u32 %v975, 4294901760
      %v1310 = vsub.f32 %v975, %v1309
      %1311 = vmatmul.mubr.f32.gmra.mrb[0].mxu0 %v1310
      %v1312 = vpop.f32.mrb[0].mxu0
      %v1313 = vadd.f32 %v1207, %v1312
      %v1314 = vpop.f32.mrb[0].mxu0
      %1315 = vmatprep.mubr.f32.mxu0 0.0
      %v1316 = vand.u32 %v978, 4294901760
      %v1317 = vsub.f32 %v978, %v1316
      %1318 = vmatmul.mubr.f32.gmra.mrb[0].mxu0 %v1317
      %v1319 = vpop.f32.mrb[0].mxu0
      %v1320 = vadd.f32 %v1213, %v1319
      %v1321 = vpop.f32.mrb[0].mxu0
      %1322 = vmatprep.mubr.f32.mxu0 0.0
      %v1323 = vand.u32 %v981, 4294901760
      %v1324 = vsub.f32 %v981, %v1323
      %1325 = vmatmul.mubr.f32.gmra.mrb[0].mxu0 %v1324
      %v1326 = vpop.f32.mrb[0].mxu0
      %v1327 = vadd.f32 %v1219, %v1326
      %v1328 = vpop.f32.mrb[0].mxu0
      %1329 = vmatprep.mubr.f32.mxu0 0.0
      %v1330 = vand.u32 %v984, 4294901760
      %v1331 = vsub.f32 %v984, %v1330
      %1332 = vmatmul.mubr.f32.gmra.mrb[0].mxu0 %v1331
      %v1333 = vpop.f32.mrb[0].mxu0
      %v1334 = vadd.f32 %v1225, %v1333
      %v1335 = vpop.f32.mrb[0].mxu0
      %1336 = vdwg.mxu0
      %1337 = vmatprep.subr.mxu0 0.0
      %v1338 = vand.u32 %v924, 4294901760
      %1339 = vmatpush1.msra.mxu0 %v1338
      %1340 = vmatprep.subr.mxu0 0.0
      %v1341 = vand.u32 %v930, 4294901760
      %1342 = vmatpush1.msra.mxu0 %v1341
      %1343 = vmatprep.subr.mxu0 0.0
      %v1344 = vand.u32 %v936, 4294901760
      %1345 = vmatpush1.msra.mxu0 %v1344
      %1346 = vmatprep.subr.mxu0 0.0
      %v1347 = vand.u32 %v942, 4294901760
      %1348 = vmatpush1.msra.mxu0 %v1347
      %1349 = vmatprep.subr.mxu0 0.0
      %v1350 = vand.u32 %v948, 4294901760
      %1351 = vmatpush1.msra.mxu0 %v1350
      %1352 = vmatprep.subr.mxu0 0.0
      %v1353 = vand.u32 %v954, 4294901760
      %1354 = vmatpush1.msra.mxu0 %v1353
      %1355 = vmatprep.subr.mxu0 0.0
      %v1356 = vand.u32 %v960, 4294901760
      %1357 = vmatpush1.msra.mxu0 %v1356
      %1358 = vmatprep.subr.mxu0 0.0
      %v1359 = vand.u32 %v966, 4294901760
      %1360 = vmatpush1.msra.mxu0 %v1359
      %1361 = vmatprep.subr.mxu0 0.0
      %1362 = vmatpush1.msra.mxu0 0.0
      %1363 = vmatprep.subr.mxu0 0.0
      %1364 = vmatpush1.msra.mxu0 0.0
      %1365 = vmatprep.subr.mxu0 0.0
      %1366 = vmatpush1.msra.mxu0 0.0
      %1367 = vmatprep.subr.mxu0 0.0
      %1368 = vmatpush1.msra.mxu0 0.0
      %1369 = vmatprep.subr.mxu0 0.0
      %1370 = vmatpush1.msra.mxu0 0.0
      %1371 = vmatprep.subr.mxu0 0.0
      %1372 = vmatpush1.msra.mxu0 0.0
      %1373 = vmatprep.subr.mxu0 0.0
      %1374 = vmatpush1.msra.mxu0 0.0
      %1375 = vmatprep.subr.mxu0 0.0
      %1376 = vmatpush1.msra.mxu0 0.0
      %1377 = vmatprep.subr.mxu0 0.0
      %1378 = vmatpush1.msra.mxu0 0.0
      %1379 = vmatprep.subr.mxu0 0.0
      %1380 = vmatpush1.msra.mxu0 0.0
      %1381 = vmatprep.subr.mxu0 0.0
      %1382 = vmatpush1.msra.mxu0 0.0
      %1383 = vmatprep.subr.mxu0 0.0
      %1384 = vmatpush1.msra.mxu0 0.0
      %1385 = vmatprep.subr.mxu0 0.0
      %1386 = vmatpush1.msra.mxu0 0.0
      %1387 = vmatprep.subr.mxu0 0.0
      %1388 = vmatpush1.msra.mxu0 0.0
      %1389 = vmatprep.subr.mxu0 0.0
      %1390 = vmatpush1.msra.mxu0 0.0
      %1391 = vmatprep.subr.mxu0 0.0
      %1392 = vmatpush1.msra.mxu0 0.0
      %1393 = vmatprep.subr.mxu0 0.0
      %1394 = vmatpush1.msra.mxu0 0.0
      %1395 = vmatprep.subr.mxu0 0.0
      %1396 = vmatpush1.msra.mxu0 0.0
      %1397 = vmatprep.subr.mxu0 0.0
      %1398 = vmatpush1.msra.mxu0 0.0
      %1399 = vmatprep.subr.mxu0 0.0
      %1400 = vmatpush1.msra.mxu0 0.0
      %1401 = vmatprep.subr.mxu0 0.0
      %1402 = vmatpush1.msra.mxu0 0.0
      %1403 = vmatprep.subr.mxu0 0.0
      %1404 = vmatpush1.msra.mxu0 0.0
      %1405 = vmatprep.subr.mxu0 0.0
      %1406 = vmatpush1.msra.mxu0 0.0
      %1407 = vmatprep.subr.mxu0 0.0
      %1408 = vmatpush1.msra.mxu0 0.0
      %1409 = vmatprep.mubr.f32.mxu0 0.0
      %v1410 = vand.u32 %v975, 4294901760
      %v1411 = vsub.f32 %v975, %v1410
      %v1412 = vand.u32 %v1411, 4294901760
      %1413 = vmatmul.mubr.f32.gmra.mrb[0].mxu0 %v1412
      %v1414 = vpop.f32.mrb[0].mxu0
      %v1415 = vadd.f32 %v1313, %v1414
      %v1416 = vpop.f32.mrb[0].mxu0
      %1417 = vmatprep.mubr.f32.mxu0 0.0
      %v1418 = vand.u32 %v978, 4294901760
      %v1419 = vsub.f32 %v978, %v1418
      %v1420 = vand.u32 %v1419, 4294901760
      %1421 = vmatmul.mubr.f32.gmra.mrb[0].mxu0 %v1420
      %v1422 = vpop.f32.mrb[0].mxu0
      %v1423 = vadd.f32 %v1320, %v1422
      %v1424 = vpop.f32.mrb[0].mxu0
      %1425 = vmatprep.mubr.f32.mxu0 0.0
      %v1426 = vand.u32 %v981, 4294901760
      %v1427 = vsub.f32 %v981, %v1426
      %v1428 = vand.u32 %v1427, 4294901760
      %1429 = vmatmul.mubr.f32.gmra.mrb[0].mxu0 %v1428
      %v1430 = vpop.f32.mrb[0].mxu0
      %v1431 = vadd.f32 %v1327, %v1430
      %v1432 = vpop.f32.mrb[0].mxu0
      %1433 = vmatprep.mubr.f32.mxu0 0.0
      %v1434 = vand.u32 %v984, 4294901760
      %v1435 = vsub.f32 %v984, %v1434
      %v1436 = vand.u32 %v1435, 4294901760
      %1437 = vmatmul.mubr.f32.gmra.mrb[0].mxu0 %v1436
      %v1438 = vpop.f32.mrb[0].mxu0
      %v1439 = vadd.f32 %v1334, %v1438
      %v1440 = vpop.f32.mrb[0].mxu0
      %1441 = vdwg.mxu0
      %1442 = vmatprep.subr.mxu0 0.0
      %v1443 = vand.u32 %v924, 4294901760
      %v1444 = vsub.f32 %v924, %v1443
      %v1445 = vand.u32 %v1444, 4294901760
      %1446 = vmatpush1.msra.mxu0 %v1445
      %1447 = vmatprep.subr.mxu0 0.0
      %v1448 = vand.u32 %v930, 4294901760
      %v1449 = vsub.f32 %v930, %v1448
      %v1450 = vand.u32 %v1449, 4294901760
      %1451 = vmatpush1.msra.mxu0 %v1450
      %1452 = vmatprep.subr.mxu0 0.0
      %v1453 = vand.u32 %v936, 4294901760
      %v1454 = vsub.f32 %v936, %v1453
      %v1455 = vand.u32 %v1454, 4294901760
      %1456 = vmatpush1.msra.mxu0 %v1455
      %1457 = vmatprep.subr.mxu0 0.0
      %v1458 = vand.u32 %v942, 4294901760
      %v1459 = vsub.f32 %v942, %v1458
      %v1460 = vand.u32 %v1459, 4294901760
      %1461 = vmatpush1.msra.mxu0 %v1460
      %1462 = vmatprep.subr.mxu0 0.0
      %v1463 = vand.u32 %v948, 4294901760
      %v1464 = vsub.f32 %v948, %v1463
      %v1465 = vand.u32 %v1464, 4294901760
      %1466 = vmatpush1.msra.mxu0 %v1465
      %1467 = vmatprep.subr.mxu0 0.0
      %v1468 = vand.u32 %v954, 4294901760
      %v1469 = vsub.f32 %v954, %v1468
      %v1470 = vand.u32 %v1469, 4294901760
      %1471 = vmatpush1.msra.mxu0 %v1470
      %1472 = vmatprep.subr.mxu0 0.0
      %v1473 = vand.u32 %v960, 4294901760
      %v1474 = vsub.f32 %v960, %v1473
      %v1475 = vand.u32 %v1474, 4294901760
      %1476 = vmatpush1.msra.mxu0 %v1475
      %1477 = vmatprep.subr.mxu0 0.0
      %v1478 = vand.u32 %v966, 4294901760
      %v1479 = vsub.f32 %v966, %v1478
      %v1480 = vand.u32 %v1479, 4294901760
      %1481 = vmatpush1.msra.mxu0 %v1480
      %1482 = vmatprep.subr.mxu0 0.0
      %1483 = vmatpush1.msra.mxu0 0.0
      %1484 = vmatprep.subr.mxu0 0.0
      %1485 = vmatpush1.msra.mxu0 0.0
      %1486 = vmatprep.subr.mxu0 0.0
      %1487 = vmatpush1.msra.mxu0 0.0
      %1488 = vmatprep.subr.mxu0 0.0
      %1489 = vmatpush1.msra.mxu0 0.0
      %1490 = vmatprep.subr.mxu0 0.0
      %1491 = vmatpush1.msra.mxu0 0.0
      %1492 = vmatprep.subr.mxu0 0.0
      %1493 = vmatpush1.msra.mxu0 0.0
      %1494 = vmatprep.subr.mxu0 0.0
      %1495 = vmatpush1.msra.mxu0 0.0
      %1496 = vmatprep.subr.mxu0 0.0
      %1497 = vmatpush1.msra.mxu0 0.0
      %1498 = vmatprep.subr.mxu0 0.0
      %1499 = vmatpush1.msra.mxu0 0.0
      %1500 = vmatprep.subr.mxu0 0.0
      %1501 = vmatpush1.msra.mxu0 0.0
      %1502 = vmatprep.subr.mxu0 0.0
      %1503 = vmatpush1.msra.mxu0 0.0
      %1504 = vmatprep.subr.mxu0 0.0
      %1505 = vmatpush1.msra.mxu0 0.0
      %1506 = vmatprep.subr.mxu0 0.0
      %1507 = vmatpush1.msra.mxu0 0.0
      %1508 = vmatprep.subr.mxu0 0.0
      %1509 = vmatpush1.msra.mxu0 0.0
      %1510 = vmatprep.subr.mxu0 0.0
      %1511 = vmatpush1.msra.mxu0 0.0
      %1512 = vmatprep.subr.mxu0 0.0
      %1513 = vmatpush1.msra.mxu0 0.0
      %1514 = vmatprep.subr.mxu0 0.0
      %1515 = vmatpush1.msra.mxu0 0.0
      %1516 = vmatprep.subr.mxu0 0.0
      %1517 = vmatpush1.msra.mxu0 0.0
      %1518 = vmatprep.subr.mxu0 0.0
      %1519 = vmatpush1.msra.mxu0 0.0
      %1520 = vmatprep.subr.mxu0 0.0
      %1521 = vmatpush1.msra.mxu0 0.0
      %1522 = vmatprep.subr.mxu0 0.0
      %1523 = vmatpush1.msra.mxu0 0.0
      %1524 = vmatprep.subr.mxu0 0.0
      %1525 = vmatpush1.msra.mxu0 0.0
      %1526 = vmatprep.subr.mxu0 0.0
      %1527 = vmatpush1.msra.mxu0 0.0
      %1528 = vmatprep.subr.mxu0 0.0
      %1529 = vmatpush1.msra.mxu0 0.0
      %1530 = vmatprep.mubr.f32.mxu0 0.0
      %v1531 = vand.u32 %v975, 4294901760
      %1532 = vmatmul.mubr.f32.gmra.mrb[0].mxu0 %v1531
      %v1533 = vpop.f32.mrb[0].mxu0
      %v1534 = vadd.f32 %v1415, %v1533
      %v1535 = vpop.f32.mrb[0].mxu0
      %1536 = vmatprep.mubr.f32.mxu0 0.0
      %v1537 = vand.u32 %v978, 4294901760
      %1538 = vmatmul.mubr.f32.gmra.mrb[0].mxu0 %v1537
      %v1539 = vpop.f32.mrb[0].mxu0
      %v1540 = vadd.f32 %v1423, %v1539
      %v1541 = vpop.f32.mrb[0].mxu0
      %1542 = vmatprep.mubr.f32.mxu0 0.0
      %v1543 = vand.u32 %v981, 4294901760
      %1544 = vmatmul.mubr.f32.gmra.mrb[0].mxu0 %v1543
      %v1545 = vpop.f32.mrb[0].mxu0
      %v1546 = vadd.f32 %v1431, %v1545
      %v1547 = vpop.f32.mrb[0].mxu0
      %1548 = vmatprep.mubr.f32.mxu0 0.0
      %v1549 = vand.u32 %v984, 4294901760
      %1550 = vmatmul.mubr.f32.gmra.mrb[0].mxu0 %v1549
      %v1551 = vpop.f32.mrb[0].mxu0
      %v1552 = vadd.f32 %v1439, %v1551
      %v1553 = vpop.f32.mrb[0].mxu0
      %1554 = vdwg.mxu0
      %1555 = vmatprep.subr.mxu0 0.0
      %v1556 = vand.u32 %v924, 4294901760
      %1557 = vmatpush1.msra.mxu0 %v1556
      %1558 = vmatprep.subr.mxu0 0.0
      %v1559 = vand.u32 %v930, 4294901760
      %1560 = vmatpush1.msra.mxu0 %v1559
      %1561 = vmatprep.subr.mxu0 0.0
      %v1562 = vand.u32 %v936, 4294901760
      %1563 = vmatpush1.msra.mxu0 %v1562
      %1564 = vmatprep.subr.mxu0 0.0
      %v1565 = vand.u32 %v942, 4294901760
      %1566 = vmatpush1.msra.mxu0 %v1565
      %1567 = vmatprep.subr.mxu0 0.0
      %v1568 = vand.u32 %v948, 4294901760
      %1569 = vmatpush1.msra.mxu0 %v1568
      %1570 = vmatprep.subr.mxu0 0.0
      %v1571 = vand.u32 %v954, 4294901760
      %1572 = vmatpush1.msra.mxu0 %v1571
      %1573 = vmatprep.subr.mxu0 0.0
      %v1574 = vand.u32 %v960, 4294901760
      %1575 = vmatpush1.msra.mxu0 %v1574
      %1576 = vmatprep.subr.mxu0 0.0
      %v1577 = vand.u32 %v966, 4294901760
      %1578 = vmatpush1.msra.mxu0 %v1577
      %1579 = vmatprep.subr.mxu0 0.0
      %1580 = vmatpush1.msra.mxu0 0.0
      %1581 = vmatprep.subr.mxu0 0.0
      %1582 = vmatpush1.msra.mxu0 0.0
      %1583 = vmatprep.subr.mxu0 0.0
      %1584 = vmatpush1.msra.mxu0 0.0
      %1585 = vmatprep.subr.mxu0 0.0
      %1586 = vmatpush1.msra.mxu0 0.0
      %1587 = vmatprep.subr.mxu0 0.0
      %1588 = vmatpush1.msra.mxu0 0.0
      %1589 = vmatprep.subr.mxu0 0.0
      %1590 = vmatpush1.msra.mxu0 0.0
      %1591 = vmatprep.subr.mxu0 0.0
      %1592 = vmatpush1.msra.mxu0 0.0
      %1593 = vmatprep.subr.mxu0 0.0
      %1594 = vmatpush1.msra.mxu0 0.0
      %1595 = vmatprep.subr.mxu0 0.0
      %1596 = vmatpush1.msra.mxu0 0.0
      %1597 = vmatprep.subr.mxu0 0.0
      %1598 = vmatpush1.msra.mxu0 0.0
      %1599 = vmatprep.subr.mxu0 0.0
      %1600 = vmatpush1.msra.mxu0 0.0
      %1601 = vmatprep.subr.mxu0 0.0
      %1602 = vmatpush1.msra.mxu0 0.0
      %1603 = vmatprep.subr.mxu0 0.0
      %1604 = vmatpush1.msra.mxu0 0.0
      %1605 = vmatprep.subr.mxu0 0.0
      %1606 = vmatpush1.msra.mxu0 0.0
      %1607 = vmatprep.subr.mxu0 0.0
      %1608 = vmatpush1.msra.mxu0 0.0
      %1609 = vmatprep.subr.mxu0 0.0
      %1610 = vmatpush1.msra.mxu0 0.0
      %1611 = vmatprep.subr.mxu0 0.0
      %1612 = vmatpush1.msra.mxu0 0.0
      %1613 = vmatprep.subr.mxu0 0.0
      %1614 = vmatpush1.msra.mxu0 0.0
      %1615 = vmatprep.subr.mxu0 0.0
      %1616 = vmatpush1.msra.mxu0 0.0
      %1617 = vmatprep.subr.mxu0 0.0
      %1618 = vmatpush1.msra.mxu0 0.0
      %1619 = vmatprep.subr.mxu0 0.0
      %1620 = vmatpush1.msra.mxu0 0.0
      %1621 = vmatprep.subr.mxu0 0.0
      %1622 = vmatpush1.msra.mxu0 0.0
      %1623 = vmatprep.subr.mxu0 0.0
      %1624 = vmatpush1.msra.mxu0 0.0
      %1625 = vmatprep.subr.mxu0 0.0
      %1626 = vmatpush1.msra.mxu0 0.0
      %1627 = vmatprep.mubr.f32.mxu0 0.0
      %v1628 = vand.u32 %v975, 4294901760
      %1629 = vmatmul.mubr.f32.gmra.mrb[0].mxu0 %v1628
      %v1630 = vpop.f32.mrb[0].mxu0
      %v1631 = vadd.f32 %v1534, %v1630
      %v1632 = vpop.f32.mrb[0].mxu0
      %1633 = vmatprep.mubr.f32.mxu0 0.0
      %v1634 = vand.u32 %v978, 4294901760
      %1635 = vmatmul.mubr.f32.gmra.mrb[0].mxu0 %v1634
      %v1636 = vpop.f32.mrb[0].mxu0
      %v1637 = vadd.f32 %v1540, %v1636
      %v1638 = vpop.f32.mrb[0].mxu0
      %1639 = vmatprep.mubr.f32.mxu0 0.0
      %v1640 = vand.u32 %v981, 4294901760
      %1641 = vmatmul.mubr.f32.gmra.mrb[0].mxu0 %v1640
      %v1642 = vpop.f32.mrb[0].mxu0
      %v1643 = vadd.f32 %v1546, %v1642
      %v1644 = vpop.f32.mrb[0].mxu0
      %1645 = vmatprep.mubr.f32.mxu0 0.0
      %v1646 = vand.u32 %v984, 4294901760
      %1647 = vmatmul.mubr.f32.gmra.mrb[0].mxu0 %v1646
      %v1648 = vpop.f32.mrb[0].mxu0
      %v1649 = vadd.f32 %v1552, %v1648
      %v1650 = vpop.f32.mrb[0].mxu0
      %1651 = vdwg.mxu0
      %vm1652 = vcmask 64512
      %1653 = vst.msk [vmem:[%s172] sm:$0xff] %vm1652, %v1631
      %1654 = vst.msk [vmem:[%s172 + $0x8] sm:$0xff] %vm1652, %v1637
      %1655 = vst.msk [vmem:[%s172 + $0x10] sm:$0xff] %vm1652, %v1643
      %1656 = vst.msk [vmem:[%s172 + $0x18] sm:$0xff] %vm1652, %v1649
      %s1657 = smul.u32 4, %s14
      %p1658 = scmp.lt.s32.totalorder %s1657, 7
      %s1659 = scalar_select %p1658, %s1657, 7
      %s1660 = smul.addr %s1659, 8
      %s1661 = scalar_lea.vmem %s3, %s1660
      // Predicated region
      $region33: #{tpu_custom_call.1} parent=31 // pred_check
        %p1662 = pneg %p100
      $region34: #{tpu_custom_call.1} parent=31 // pred_check_branch
        %1664 = sbr.rel (%p1662) target = $region36
      $region35: #{tpu_custom_call.1} parent=31 // pred_region
        %s1665 = smul.u32 4, %s14
      $region36: #{tpu_custom_call.1} parent=31 // pred_fallthru
        _
    $region32: #{tpu_custom_call.1} parent=5 // pred_fallthru
      _
    %p1666 = scmp.le.s32.totalorder 2, %s9
    // Predicated region
    $region37: #{tpu_custom_call.1} parent=5 // pred_check
      %p1667 = pneg %p1666
    $region38: #{tpu_custom_call.1} parent=5 // pred_check_branch
      %1669 = sbr.rel (%p1667) target = $region40
    $region39: #{tpu_custom_call.1} parent=5 // pred_region
      %s1670 = ssub.s32 %s9, 2
      // Predicated region
      $region41: #{tpu_custom_call.1} parent=39 // pred_check
        %p1671 = pneg %p106
      $region42: #{tpu_custom_call.1} parent=39 // pred_check_branch
        %1673 = sbr.rel (%p1671) target = $region44
      $region43: #{tpu_custom_call.1} parent=39 // pred_region
        %s1674 = smul.u32 4, %s15
        %p1675 = scmp.lt.s32.totalorder %s1674, 7
        %s1676 = scalar_select %p1675, %s1674, 7
        %s1677 = smul.addr %s1676, 8
        %s1678 = scalar_lea.vmem %s3, %s1677
      $region44: #{tpu_custom_call.1} parent=39 // pred_fallthru
        _
    $region40: #{tpu_custom_call.1} parent=5 // pred_fallthru
      _
  $region6: #{tpu_custom_call.1} parent=0 // loop_footer
    %s13 = sadd.s32 1, %s9
  $region7: #{tpu_custom_call.1} parent=0 // loop_footer_branch
    %8 = sbr.rel target = $region3
  $region8: #{tpu_custom_call.1} parent=0 // loop_exit
    _

</llo_original>
